<compile_context>
chip_gen: v7x
topology: tpu7x:2x2x1
jax: 0.10.0
libtpu: 0.0.40
codegen_flags: <defaults>
</compile_context>

<pallas_src>
import jax
import jax.numpy as jnp
from jax.experimental import pallas as pl
from jax.experimental.pallas import tpu as pltpu

CIN, COUT, KH, KW = 3, 3, 3, 3


def conv3x3_kernel(w_ref, b_ref, x_ref, o_ref):
    # w_ref: SMEM (COUT*CIN*KH*KW,) flat weights
    # b_ref: SMEM (COUT,) bias
    # x_ref: VMEM (CIN, H+2, L+2)  packed band (Nb images side by side + halo)
    # o_ref: VMEM (COUT, H, L)     packed output band, L = Nb*(W+2)
    _, H, L = o_ref.shape
    # One accumulator per output channel: each shifted input band is loaded once
    # and reused by all COUT channels (27 band slices instead of 81).
    accs = [jnp.full((H, L), b_ref[co], dtype=jnp.float32) for co in range(COUT)]
    for ci in range(CIN):
        for kh in range(KH):
            for kw in range(KW):
                band = x_ref[ci, kh:kh + H, kw:kw + L]   # full-width lane-dense slab
                for co in range(COUT):
                    wv = w_ref[((co * CIN + ci) * KH + kh) * KW + kw]
                    accs[co] = accs[co] + band * wv
    for co in range(COUT):
        o_ref[co, :, :] = accs[co]


def conv2d_pallas(x, weight, bias, images_per_block=8):
    """x: (N, CIN, H, W) f32, weight: (COUT, CIN, 3, 3), bias: (COUT,). Returns (N, COUT, H, W)."""
    N, C, H, W = x.shape
    assert C == CIN
    x = x.astype(jnp.float32)
    Hp, Wp = H + 2, W + 2

    Nb = min(images_per_block, N)          # images packed per grid step (lane-dense)
    G = -(-N // Nb)                        # number of grid steps (>=2 keeps both v7x TCs busy)
    Npad = G * Nb
    if Npad != N:
        x = jnp.concatenate([x, jnp.zeros((Npad - N, C, H, W), jnp.float32)], axis=0)

    # Spatial zero-pad (padding=1).
    # TODO(synk): for large H/W, fetch halos via overlapping BlockSpec windows / an
    # H-tile grid axis instead of materializing a padded HBM copy (and to keep the
    # per-block VMEM footprint bounded on 64 MiB v7x parts).
    xp = jnp.pad(x, ((0, 0), (0, 0), (1, 1), (1, 1)))            # (Npad, CIN, Hp, Wp)

    # Pack Nb images along the lane axis: (G, CIN, Hp, Nb*Wp), then add one extra
    # zero column at each end of the band so kw = 0/1/2 slices stay in bounds.
    L = Nb * Wp
    xp = xp.reshape(G, Nb, CIN, Hp, Wp).transpose(0, 2, 3, 1, 4).reshape(G, CIN, Hp, L)
    xp = jnp.pad(xp, ((0, 0), (0, 0), (0, 0), (1, 1)))           # (G, CIN, Hp, L + 2)

    w_flat = weight.reshape(-1).astype(jnp.float32)
    b_flat = bias.astype(jnp.float32)

    out_packed = pl.pallas_call(
        conv3x3_kernel,
        out_shape=jax.ShapeDtypeStruct((G, COUT, H, L), jnp.float32),
        grid_spec=pltpu.PrefetchScalarGridSpec(
            num_scalar_prefetch=0,
            grid=(G,),
            in_specs=[
                pl.BlockSpec(memory_space=pltpu.SMEM),                      # flat weights
                pl.BlockSpec(memory_space=pltpu.SMEM),                      # bias
                pl.BlockSpec((None, CIN, Hp, L + 2), lambda g: (g, 0, 0, 0)),
            ],
            out_specs=pl.BlockSpec((None, COUT, H, L), lambda g: (g, 0, 0, 0)),
        ),
        compiler_params=pltpu.CompilerParams(
            dimension_semantics=("parallel",),
        ),
    )(w_flat, b_flat, xp)

    # Unpack: (G, COUT, H, Nb, Wp) -> drop per-image halo columns -> (N, COUT, H, W)
    out = out_packed.reshape(G, COUT, H, Nb, Wp)[..., 1:1 + W]
    out = out.transpose(0, 3, 1, 2, 4).reshape(Npad, COUT, H, W)
    return out[:N]


if __name__ == "__main__":
    key = jax.random.PRNGKey(0)
    kx, kwt, kb = jax.random.split(key, 3)

    # Small input consistent with Conv2d(3, 3, 3, 1, 1): NCHW = (16, 3, 16, 16)
    # (16 images -> 2 grid steps of 8 lane-packed images each).
    N, H, W = 16, 16, 16
    x = jax.random.normal(kx, (N, CIN, H, W), dtype=jnp.float32)
    weight = jax.random.normal(kwt, (COUT, CIN, KH, KW), dtype=jnp.float32) * 0.1
    bias = jax.random.normal(kb, (COUT,), dtype=jnp.float32) * 0.1

    conv = jax.jit(conv2d_pallas)
    out = conv(x, weight, bias)
    out = jax.block_until_ready(out)

    # Sanity check against XLA's conv.
    ref = jax.lax.conv_general_dilated(
        x, weight, window_strides=(1, 1), padding=((1, 1), (1, 1)),
        dimension_numbers=("NCHW", "OIHW", "NCHW"),
    ) + bias.reshape(1, COUT, 1, 1)
    assert out.shape == ref.shape
    assert jnp.allclose(out, ref, atol=1e-4, rtol=1e-4)

    print("KERNEL_OK")
</pallas_src>

<mosaic_0001>
module attributes {stable_mosaic.version = 11 : i64} {
  func.func @conv3x3_kernel(%arg0: i32, %arg1: memref<81xf32, #tpu.memory_space<smem>>, %arg2: memref<3xf32, #tpu.memory_space<smem>>, %arg3: memref<1x3x18x146xf32, #tpu.memory_space<vmem>>, %arg4: memref<1x3x16x144xf32, #tpu.memory_space<vmem>>) attributes {dimension_semantics = [#tpu.dimension_semantics<parallel>], iteration_bounds = array<i64: 2>, scalar_prefetch = 0 : i64, scratch_operands = 0 : i64, tpu.core_type = #tpu.core_type<tc>, window_params = [{transform_indices = @transform_0, window_bounds = array<i64: 81>}, {transform_indices = @transform_1, window_bounds = array<i64: 3>}, {transform_indices = @transform_2, window_bounds = array<i64: 1, 3, 18, 146>}, {transform_indices = @transform_3, window_bounds = array<i64: 1, 3, 16, 144>}]} {
    %c0 = arith.constant 0 : index
    %0 = memref.load %arg2[%c0] : memref<3xf32, #tpu.memory_space<smem>>
    %1 = vector.broadcast %0 : f32 to vector<16x144xf32>
    %c1 = arith.constant 1 : index
    %2 = memref.load %arg2[%c1] : memref<3xf32, #tpu.memory_space<smem>>
    %3 = vector.broadcast %2 : f32 to vector<16x144xf32>
    %c2 = arith.constant 2 : index
    %4 = memref.load %arg2[%c2] : memref<3xf32, #tpu.memory_space<smem>>
    %5 = vector.broadcast %4 : f32 to vector<16x144xf32>
    %c0_0 = arith.constant 0 : index
    %c0_1 = arith.constant 0 : index
    %c0_2 = arith.constant 0 : index
    %c0_3 = arith.constant 0 : index
    %6 = vector.load %arg3[%c0_0, %c0_1, %c0_2, %c0_3] : memref<1x3x18x146xf32, #tpu.memory_space<vmem>>, vector<1x1x16x144xf32>
    %7 = vector.shape_cast %6 : vector<1x1x16x144xf32> to vector<16x144xf32>
    %c0_4 = arith.constant 0 : index
    %8 = memref.load %arg1[%c0_4] : memref<81xf32, #tpu.memory_space<smem>>
    %9 = vector.broadcast %8 : f32 to vector<16x144xf32>
    %10 = arith.mulf %7, %9 : vector<16x144xf32>
    %11 = arith.addf %1, %10 : vector<16x144xf32>
    %c27 = arith.constant 27 : index
    %12 = memref.load %arg1[%c27] : memref<81xf32, #tpu.memory_space<smem>>
    %13 = vector.broadcast %12 : f32 to vector<16x144xf32>
    %14 = arith.mulf %7, %13 : vector<16x144xf32>
    %15 = arith.addf %3, %14 : vector<16x144xf32>
    %c54 = arith.constant 54 : index
    %16 = memref.load %arg1[%c54] : memref<81xf32, #tpu.memory_space<smem>>
    %17 = vector.broadcast %16 : f32 to vector<16x144xf32>
    %18 = arith.mulf %7, %17 : vector<16x144xf32>
    %19 = arith.addf %5, %18 : vector<16x144xf32>
    %c0_5 = arith.constant 0 : index
    %c0_6 = arith.constant 0 : index
    %c0_7 = arith.constant 0 : index
    %c1_8 = arith.constant 1 : index
    %20 = vector.load %arg3[%c0_5, %c0_6, %c0_7, %c1_8] : memref<1x3x18x146xf32, #tpu.memory_space<vmem>>, vector<1x1x16x144xf32>
    %21 = vector.shape_cast %20 : vector<1x1x16x144xf32> to vector<16x144xf32>
    %c1_9 = arith.constant 1 : index
    %22 = memref.load %arg1[%c1_9] : memref<81xf32, #tpu.memory_space<smem>>
    %23 = vector.broadcast %22 : f32 to vector<16x144xf32>
    %24 = arith.mulf %21, %23 : vector<16x144xf32>
    %25 = arith.addf %11, %24 : vector<16x144xf32>
    %c28 = arith.constant 28 : index
    %26 = memref.load %arg1[%c28] : memref<81xf32, #tpu.memory_space<smem>>
    %27 = vector.broadcast %26 : f32 to vector<16x144xf32>
    %28 = arith.mulf %21, %27 : vector<16x144xf32>
    %29 = arith.addf %15, %28 : vector<16x144xf32>
    %c55 = arith.constant 55 : index
    %30 = memref.load %arg1[%c55] : memref<81xf32, #tpu.memory_space<smem>>
    %31 = vector.broadcast %30 : f32 to vector<16x144xf32>
    %32 = arith.mulf %21, %31 : vector<16x144xf32>
    %33 = arith.addf %19, %32 : vector<16x144xf32>
    %c0_10 = arith.constant 0 : index
    %c0_11 = arith.constant 0 : index
    %c0_12 = arith.constant 0 : index
    %c2_13 = arith.constant 2 : index
    %34 = vector.load %arg3[%c0_10, %c0_11, %c0_12, %c2_13] : memref<1x3x18x146xf32, #tpu.memory_space<vmem>>, vector<1x1x16x144xf32>
    %35 = vector.shape_cast %34 : vector<1x1x16x144xf32> to vector<16x144xf32>
    %c2_14 = arith.constant 2 : index
    %36 = memref.load %arg1[%c2_14] : memref<81xf32, #tpu.memory_space<smem>>
    %37 = vector.broadcast %36 : f32 to vector<16x144xf32>
    %38 = arith.mulf %35, %37 : vector<16x144xf32>
    %39 = arith.addf %25, %38 : vector<16x144xf32>
    %c29 = arith.constant 29 : index
    %40 = memref.load %arg1[%c29] : memref<81xf32, #tpu.memory_space<smem>>
    %41 = vector.broadcast %40 : f32 to vector<16x144xf32>
    %42 = arith.mulf %35, %41 : vector<16x144xf32>
    %43 = arith.addf %29, %42 : vector<16x144xf32>
    %c56 = arith.constant 56 : index
    %44 = memref.load %arg1[%c56] : memref<81xf32, #tpu.memory_space<smem>>
    %45 = vector.broadcast %44 : f32 to vector<16x144xf32>
    %46 = arith.mulf %35, %45 : vector<16x144xf32>
    %47 = arith.addf %33, %46 : vector<16x144xf32>
    %c0_15 = arith.constant 0 : index
    %c0_16 = arith.constant 0 : index
    %c1_17 = arith.constant 1 : index
    %c0_18 = arith.constant 0 : index
    %48 = vector.load %arg3[%c0_15, %c0_16, %c1_17, %c0_18] : memref<1x3x18x146xf32, #tpu.memory_space<vmem>>, vector<1x1x16x144xf32>
    %49 = vector.shape_cast %48 : vector<1x1x16x144xf32> to vector<16x144xf32>
    %c3 = arith.constant 3 : index
    %50 = memref.load %arg1[%c3] : memref<81xf32, #tpu.memory_space<smem>>
    %51 = vector.broadcast %50 : f32 to vector<16x144xf32>
    %52 = arith.mulf %49, %51 : vector<16x144xf32>
    %53 = arith.addf %39, %52 : vector<16x144xf32>
    %c30 = arith.constant 30 : index
    %54 = memref.load %arg1[%c30] : memref<81xf32, #tpu.memory_space<smem>>
    %55 = vector.broadcast %54 : f32 to vector<16x144xf32>
    %56 = arith.mulf %49, %55 : vector<16x144xf32>
    %57 = arith.addf %43, %56 : vector<16x144xf32>
    %c57 = arith.constant 57 : index
    %58 = memref.load %arg1[%c57] : memref<81xf32, #tpu.memory_space<smem>>
    %59 = vector.broadcast %58 : f32 to vector<16x144xf32>
    %60 = arith.mulf %49, %59 : vector<16x144xf32>
    %61 = arith.addf %47, %60 : vector<16x144xf32>
    %c0_19 = arith.constant 0 : index
    %c0_20 = arith.constant 0 : index
    %c1_21 = arith.constant 1 : index
    %c1_22 = arith.constant 1 : index
    %62 = vector.load %arg3[%c0_19, %c0_20, %c1_21, %c1_22] : memref<1x3x18x146xf32, #tpu.memory_space<vmem>>, vector<1x1x16x144xf32>
    %63 = vector.shape_cast %62 : vector<1x1x16x144xf32> to vector<16x144xf32>
    %c4 = arith.constant 4 : index
    %64 = memref.load %arg1[%c4] : memref<81xf32, #tpu.memory_space<smem>>
    %65 = vector.broadcast %64 : f32 to vector<16x144xf32>
    %66 = arith.mulf %63, %65 : vector<16x144xf32>
    %67 = arith.addf %53, %66 : vector<16x144xf32>
    %c31 = arith.constant 31 : index
    %68 = memref.load %arg1[%c31] : memref<81xf32, #tpu.memory_space<smem>>
    %69 = vector.broadcast %68 : f32 to vector<16x144xf32>
    %70 = arith.mulf %63, %69 : vector<16x144xf32>
    %71 = arith.addf %57, %70 : vector<16x144xf32>
    %c58 = arith.constant 58 : index
    %72 = memref.load %arg1[%c58] : memref<81xf32, #tpu.memory_space<smem>>
    %73 = vector.broadcast %72 : f32 to vector<16x144xf32>
    %74 = arith.mulf %63, %73 : vector<16x144xf32>
    %75 = arith.addf %61, %74 : vector<16x144xf32>
    %c0_23 = arith.constant 0 : index
    %c0_24 = arith.constant 0 : index
    %c1_25 = arith.constant 1 : index
    %c2_26 = arith.constant 2 : index
    %76 = vector.load %arg3[%c0_23, %c0_24, %c1_25, %c2_26] : memref<1x3x18x146xf32, #tpu.memory_space<vmem>>, vector<1x1x16x144xf32>
    %77 = vector.shape_cast %76 : vector<1x1x16x144xf32> to vector<16x144xf32>
    %c5 = arith.constant 5 : index
    %78 = memref.load %arg1[%c5] : memref<81xf32, #tpu.memory_space<smem>>
    %79 = vector.broadcast %78 : f32 to vector<16x144xf32>
    %80 = arith.mulf %77, %79 : vector<16x144xf32>
    %81 = arith.addf %67, %80 : vector<16x144xf32>
    %c32 = arith.constant 32 : index
    %82 = memref.load %arg1[%c32] : memref<81xf32, #tpu.memory_space<smem>>
    %83 = vector.broadcast %82 : f32 to vector<16x144xf32>
    %84 = arith.mulf %77, %83 : vector<16x144xf32>
    %85 = arith.addf %71, %84 : vector<16x144xf32>
    %c59 = arith.constant 59 : index
    %86 = memref.load %arg1[%c59] : memref<81xf32, #tpu.memory_space<smem>>
    %87 = vector.broadcast %86 : f32 to vector<16x144xf32>
    %88 = arith.mulf %77, %87 : vector<16x144xf32>
    %89 = arith.addf %75, %88 : vector<16x144xf32>
    %c0_27 = arith.constant 0 : index
    %c0_28 = arith.constant 0 : index
    %c2_29 = arith.constant 2 : index
    %c0_30 = arith.constant 0 : index
    %90 = vector.load %arg3[%c0_27, %c0_28, %c2_29, %c0_30] : memref<1x3x18x146xf32, #tpu.memory_space<vmem>>, vector<1x1x16x144xf32>
    %91 = vector.shape_cast %90 : vector<1x1x16x144xf32> to vector<16x144xf32>
    %c6 = arith.constant 6 : index
    %92 = memref.load %arg1[%c6] : memref<81xf32, #tpu.memory_space<smem>>
    %93 = vector.broadcast %92 : f32 to vector<16x144xf32>
    %94 = arith.mulf %91, %93 : vector<16x144xf32>
    %95 = arith.addf %81, %94 : vector<16x144xf32>
    %c33 = arith.constant 33 : index
    %96 = memref.load %arg1[%c33] : memref<81xf32, #tpu.memory_space<smem>>
    %97 = vector.broadcast %96 : f32 to vector<16x144xf32>
    %98 = arith.mulf %91, %97 : vector<16x144xf32>
    %99 = arith.addf %85, %98 : vector<16x144xf32>
    %c60 = arith.constant 60 : index
    %100 = memref.load %arg1[%c60] : memref<81xf32, #tpu.memory_space<smem>>
    %101 = vector.broadcast %100 : f32 to vector<16x144xf32>
    %102 = arith.mulf %91, %101 : vector<16x144xf32>
    %103 = arith.addf %89, %102 : vector<16x144xf32>
    %c0_31 = arith.constant 0 : index
    %c0_32 = arith.constant 0 : index
    %c2_33 = arith.constant 2 : index
    %c1_34 = arith.constant 1 : index
    %104 = vector.load %arg3[%c0_31, %c0_32, %c2_33, %c1_34] : memref<1x3x18x146xf32, #tpu.memory_space<vmem>>, vector<1x1x16x144xf32>
    %105 = vector.shape_cast %104 : vector<1x1x16x144xf32> to vector<16x144xf32>
    %c7 = arith.constant 7 : index
    %106 = memref.load %arg1[%c7] : memref<81xf32, #tpu.memory_space<smem>>
    %107 = vector.broadcast %106 : f32 to vector<16x144xf32>
    %108 = arith.mulf %105, %107 : vector<16x144xf32>
    %109 = arith.addf %95, %108 : vector<16x144xf32>
    %c34 = arith.constant 34 : index
    %110 = memref.load %arg1[%c34] : memref<81xf32, #tpu.memory_space<smem>>
    %111 = vector.broadcast %110 : f32 to vector<16x144xf32>
    %112 = arith.mulf %105, %111 : vector<16x144xf32>
    %113 = arith.addf %99, %112 : vector<16x144xf32>
    %c61 = arith.constant 61 : index
    %114 = memref.load %arg1[%c61] : memref<81xf32, #tpu.memory_space<smem>>
    %115 = vector.broadcast %114 : f32 to vector<16x144xf32>
    %116 = arith.mulf %105, %115 : vector<16x144xf32>
    %117 = arith.addf %103, %116 : vector<16x144xf32>
    %c0_35 = arith.constant 0 : index
    %c0_36 = arith.constant 0 : index
    %c2_37 = arith.constant 2 : index
    %c2_38 = arith.constant 2 : index
    %118 = vector.load %arg3[%c0_35, %c0_36, %c2_37, %c2_38] : memref<1x3x18x146xf32, #tpu.memory_space<vmem>>, vector<1x1x16x144xf32>
    %119 = vector.shape_cast %118 : vector<1x1x16x144xf32> to vector<16x144xf32>
    %c8 = arith.constant 8 : index
    %120 = memref.load %arg1[%c8] : memref<81xf32, #tpu.memory_space<smem>>
    %121 = vector.broadcast %120 : f32 to vector<16x144xf32>
    %122 = arith.mulf %119, %121 : vector<16x144xf32>
    %123 = arith.addf %109, %122 : vector<16x144xf32>
    %c35 = arith.constant 35 : index
    %124 = memref.load %arg1[%c35] : memref<81xf32, #tpu.memory_space<smem>>
    %125 = vector.broadcast %124 : f32 to vector<16x144xf32>
    %126 = arith.mulf %119, %125 : vector<16x144xf32>
    %127 = arith.addf %113, %126 : vector<16x144xf32>
    %c62 = arith.constant 62 : index
    %128 = memref.load %arg1[%c62] : memref<81xf32, #tpu.memory_space<smem>>
    %129 = vector.broadcast %128 : f32 to vector<16x144xf32>
    %130 = arith.mulf %119, %129 : vector<16x144xf32>
    %131 = arith.addf %117, %130 : vector<16x144xf32>
    %c0_39 = arith.constant 0 : index
    %c1_40 = arith.constant 1 : index
    %c0_41 = arith.constant 0 : index
    %c0_42 = arith.constant 0 : index
    %132 = vector.load %arg3[%c0_39, %c1_40, %c0_41, %c0_42] : memref<1x3x18x146xf32, #tpu.memory_space<vmem>>, vector<1x1x16x144xf32>
    %133 = vector.shape_cast %132 : vector<1x1x16x144xf32> to vector<16x144xf32>
    %c9 = arith.constant 9 : index
    %134 = memref.load %arg1[%c9] : memref<81xf32, #tpu.memory_space<smem>>
    %135 = vector.broadcast %134 : f32 to vector<16x144xf32>
    %136 = arith.mulf %133, %135 : vector<16x144xf32>
    %137 = arith.addf %123, %136 : vector<16x144xf32>
    %c36 = arith.constant 36 : index
    %138 = memref.load %arg1[%c36] : memref<81xf32, #tpu.memory_space<smem>>
    %139 = vector.broadcast %138 : f32 to vector<16x144xf32>
    %140 = arith.mulf %133, %139 : vector<16x144xf32>
    %141 = arith.addf %127, %140 : vector<16x144xf32>
    %c63 = arith.constant 63 : index
    %142 = memref.load %arg1[%c63] : memref<81xf32, #tpu.memory_space<smem>>
    %143 = vector.broadcast %142 : f32 to vector<16x144xf32>
    %144 = arith.mulf %133, %143 : vector<16x144xf32>
    %145 = arith.addf %131, %144 : vector<16x144xf32>
    %c0_43 = arith.constant 0 : index
    %c1_44 = arith.constant 1 : index
    %c0_45 = arith.constant 0 : index
    %c1_46 = arith.constant 1 : index
    %146 = vector.load %arg3[%c0_43, %c1_44, %c0_45, %c1_46] : memref<1x3x18x146xf32, #tpu.memory_space<vmem>>, vector<1x1x16x144xf32>
    %147 = vector.shape_cast %146 : vector<1x1x16x144xf32> to vector<16x144xf32>
    %c10 = arith.constant 10 : index
    %148 = memref.load %arg1[%c10] : memref<81xf32, #tpu.memory_space<smem>>
    %149 = vector.broadcast %148 : f32 to vector<16x144xf32>
    %150 = arith.mulf %147, %149 : vector<16x144xf32>
    %151 = arith.addf %137, %150 : vector<16x144xf32>
    %c37 = arith.constant 37 : index
    %152 = memref.load %arg1[%c37] : memref<81xf32, #tpu.memory_space<smem>>
    %153 = vector.broadcast %152 : f32 to vector<16x144xf32>
    %154 = arith.mulf %147, %153 : vector<16x144xf32>
    %155 = arith.addf %141, %154 : vector<16x144xf32>
    %c64 = arith.constant 64 : index
    %156 = memref.load %arg1[%c64] : memref<81xf32, #tpu.memory_space<smem>>
    %157 = vector.broadcast %156 : f32 to vector<16x144xf32>
    %158 = arith.mulf %147, %157 : vector<16x144xf32>
    %159 = arith.addf %145, %158 : vector<16x144xf32>
    %c0_47 = arith.constant 0 : index
    %c1_48 = arith.constant 1 : index
    %c0_49 = arith.constant 0 : index
    %c2_50 = arith.constant 2 : index
    %160 = vector.load %arg3[%c0_47, %c1_48, %c0_49, %c2_50] : memref<1x3x18x146xf32, #tpu.memory_space<vmem>>, vector<1x1x16x144xf32>
    %161 = vector.shape_cast %160 : vector<1x1x16x144xf32> to vector<16x144xf32>
    %c11 = arith.constant 11 : index
    %162 = memref.load %arg1[%c11] : memref<81xf32, #tpu.memory_space<smem>>
    %163 = vector.broadcast %162 : f32 to vector<16x144xf32>
    %164 = arith.mulf %161, %163 : vector<16x144xf32>
    %165 = arith.addf %151, %164 : vector<16x144xf32>
    %c38 = arith.constant 38 : index
    %166 = memref.load %arg1[%c38] : memref<81xf32, #tpu.memory_space<smem>>
    %167 = vector.broadcast %166 : f32 to vector<16x144xf32>
    %168 = arith.mulf %161, %167 : vector<16x144xf32>
    %169 = arith.addf %155, %168 : vector<16x144xf32>
    %c65 = arith.constant 65 : index
    %170 = memref.load %arg1[%c65] : memref<81xf32, #tpu.memory_space<smem>>
    %171 = vector.broadcast %170 : f32 to vector<16x144xf32>
    %172 = arith.mulf %161, %171 : vector<16x144xf32>
    %173 = arith.addf %159, %172 : vector<16x144xf32>
    %c0_51 = arith.constant 0 : index
    %c1_52 = arith.constant 1 : index
    %c1_53 = arith.constant 1 : index
    %c0_54 = arith.constant 0 : index
    %174 = vector.load %arg3[%c0_51, %c1_52, %c1_53, %c0_54] : memref<1x3x18x146xf32, #tpu.memory_space<vmem>>, vector<1x1x16x144xf32>
    %175 = vector.shape_cast %174 : vector<1x1x16x144xf32> to vector<16x144xf32>
    %c12 = arith.constant 12 : index
    %176 = memref.load %arg1[%c12] : memref<81xf32, #tpu.memory_space<smem>>
    %177 = vector.broadcast %176 : f32 to vector<16x144xf32>
    %178 = arith.mulf %175, %177 : vector<16x144xf32>
    %179 = arith.addf %165, %178 : vector<16x144xf32>
    %c39 = arith.constant 39 : index
    %180 = memref.load %arg1[%c39] : memref<81xf32, #tpu.memory_space<smem>>
    %181 = vector.broadcast %180 : f32 to vector<16x144xf32>
    %182 = arith.mulf %175, %181 : vector<16x144xf32>
    %183 = arith.addf %169, %182 : vector<16x144xf32>
    %c66 = arith.constant 66 : index
    %184 = memref.load %arg1[%c66] : memref<81xf32, #tpu.memory_space<smem>>
    %185 = vector.broadcast %184 : f32 to vector<16x144xf32>
    %186 = arith.mulf %175, %185 : vector<16x144xf32>
    %187 = arith.addf %173, %186 : vector<16x144xf32>
    %c0_55 = arith.constant 0 : index
    %c1_56 = arith.constant 1 : index
    %c1_57 = arith.constant 1 : index
    %c1_58 = arith.constant 1 : index
    %188 = vector.load %arg3[%c0_55, %c1_56, %c1_57, %c1_58] : memref<1x3x18x146xf32, #tpu.memory_space<vmem>>, vector<1x1x16x144xf32>
    %189 = vector.shape_cast %188 : vector<1x1x16x144xf32> to vector<16x144xf32>
    %c13 = arith.constant 13 : index
    %190 = memref.load %arg1[%c13] : memref<81xf32, #tpu.memory_space<smem>>
    %191 = vector.broadcast %190 : f32 to vector<16x144xf32>
    %192 = arith.mulf %189, %191 : vector<16x144xf32>
    %193 = arith.addf %179, %192 : vector<16x144xf32>
    %c40 = arith.constant 40 : index
    %194 = memref.load %arg1[%c40] : memref<81xf32, #tpu.memory_space<smem>>
    %195 = vector.broadcast %194 : f32 to vector<16x144xf32>
    %196 = arith.mulf %189, %195 : vector<16x144xf32>
    %197 = arith.addf %183, %196 : vector<16x144xf32>
    %c67 = arith.constant 67 : index
    %198 = memref.load %arg1[%c67] : memref<81xf32, #tpu.memory_space<smem>>
    %199 = vector.broadcast %198 : f32 to vector<16x144xf32>
    %200 = arith.mulf %189, %199 : vector<16x144xf32>
    %201 = arith.addf %187, %200 : vector<16x144xf32>
    %c0_59 = arith.constant 0 : index
    %c1_60 = arith.constant 1 : index
    %c1_61 = arith.constant 1 : index
    %c2_62 = arith.constant 2 : index
    %202 = vector.load %arg3[%c0_59, %c1_60, %c1_61, %c2_62] : memref<1x3x18x146xf32, #tpu.memory_space<vmem>>, vector<1x1x16x144xf32>
    %203 = vector.shape_cast %202 : vector<1x1x16x144xf32> to vector<16x144xf32>
    %c14 = arith.constant 14 : index
    %204 = memref.load %arg1[%c14] : memref<81xf32, #tpu.memory_space<smem>>
    %205 = vector.broadcast %204 : f32 to vector<16x144xf32>
    %206 = arith.mulf %203, %205 : vector<16x144xf32>
    %207 = arith.addf %193, %206 : vector<16x144xf32>
    %c41 = arith.constant 41 : index
    %208 = memref.load %arg1[%c41] : memref<81xf32, #tpu.memory_space<smem>>
    %209 = vector.broadcast %208 : f32 to vector<16x144xf32>
    %210 = arith.mulf %203, %209 : vector<16x144xf32>
    %211 = arith.addf %197, %210 : vector<16x144xf32>
    %c68 = arith.constant 68 : index
    %212 = memref.load %arg1[%c68] : memref<81xf32, #tpu.memory_space<smem>>
    %213 = vector.broadcast %212 : f32 to vector<16x144xf32>
    %214 = arith.mulf %203, %213 : vector<16x144xf32>
    %215 = arith.addf %201, %214 : vector<16x144xf32>
    %c0_63 = arith.constant 0 : index
    %c1_64 = arith.constant 1 : index
    %c2_65 = arith.constant 2 : index
    %c0_66 = arith.constant 0 : index
    %216 = vector.load %arg3[%c0_63, %c1_64, %c2_65, %c0_66] : memref<1x3x18x146xf32, #tpu.memory_space<vmem>>, vector<1x1x16x144xf32>
    %217 = vector.shape_cast %216 : vector<1x1x16x144xf32> to vector<16x144xf32>
    %c15 = arith.constant 15 : index
    %218 = memref.load %arg1[%c15] : memref<81xf32, #tpu.memory_space<smem>>
    %219 = vector.broadcast %218 : f32 to vector<16x144xf32>
    %220 = arith.mulf %217, %219 : vector<16x144xf32>
    %221 = arith.addf %207, %220 : vector<16x144xf32>
    %c42 = arith.constant 42 : index
    %222 = memref.load %arg1[%c42] : memref<81xf32, #tpu.memory_space<smem>>
    %223 = vector.broadcast %222 : f32 to vector<16x144xf32>
    %224 = arith.mulf %217, %223 : vector<16x144xf32>
    %225 = arith.addf %211, %224 : vector<16x144xf32>
    %c69 = arith.constant 69 : index
    %226 = memref.load %arg1[%c69] : memref<81xf32, #tpu.memory_space<smem>>
    %227 = vector.broadcast %226 : f32 to vector<16x144xf32>
    %228 = arith.mulf %217, %227 : vector<16x144xf32>
    %229 = arith.addf %215, %228 : vector<16x144xf32>
    %c0_67 = arith.constant 0 : index
    %c1_68 = arith.constant 1 : index
    %c2_69 = arith.constant 2 : index
    %c1_70 = arith.constant 1 : index
    %230 = vector.load %arg3[%c0_67, %c1_68, %c2_69, %c1_70] : memref<1x3x18x146xf32, #tpu.memory_space<vmem>>, vector<1x1x16x144xf32>
    %231 = vector.shape_cast %230 : vector<1x1x16x144xf32> to vector<16x144xf32>
    %c16 = arith.constant 16 : index
    %232 = memref.load %arg1[%c16] : memref<81xf32, #tpu.memory_space<smem>>
    %233 = vector.broadcast %232 : f32 to vector<16x144xf32>
    %234 = arith.mulf %231, %233 : vector<16x144xf32>
    %235 = arith.addf %221, %234 : vector<16x144xf32>
    %c43 = arith.constant 43 : index
    %236 = memref.load %arg1[%c43] : memref<81xf32, #tpu.memory_space<smem>>
    %237 = vector.broadcast %236 : f32 to vector<16x144xf32>
    %238 = arith.mulf %231, %237 : vector<16x144xf32>
    %239 = arith.addf %225, %238 : vector<16x144xf32>
    %c70 = arith.constant 70 : index
    %240 = memref.load %arg1[%c70] : memref<81xf32, #tpu.memory_space<smem>>
    %241 = vector.broadcast %240 : f32 to vector<16x144xf32>
    %242 = arith.mulf %231, %241 : vector<16x144xf32>
    %243 = arith.addf %229, %242 : vector<16x144xf32>
    %c0_71 = arith.constant 0 : index
    %c1_72 = arith.constant 1 : index
    %c2_73 = arith.constant 2 : index
    %c2_74 = arith.constant 2 : index
    %244 = vector.load %arg3[%c0_71, %c1_72, %c2_73, %c2_74] : memref<1x3x18x146xf32, #tpu.memory_space<vmem>>, vector<1x1x16x144xf32>
    %245 = vector.shape_cast %244 : vector<1x1x16x144xf32> to vector<16x144xf32>
    %c17 = arith.constant 17 : index
    %246 = memref.load %arg1[%c17] : memref<81xf32, #tpu.memory_space<smem>>
    %247 = vector.broadcast %246 : f32 to vector<16x144xf32>
    %248 = arith.mulf %245, %247 : vector<16x144xf32>
    %249 = arith.addf %235, %248 : vector<16x144xf32>
    %c44 = arith.constant 44 : index
    %250 = memref.load %arg1[%c44] : memref<81xf32, #tpu.memory_space<smem>>
    %251 = vector.broadcast %250 : f32 to vector<16x144xf32>
    %252 = arith.mulf %245, %251 : vector<16x144xf32>
    %253 = arith.addf %239, %252 : vector<16x144xf32>
    %c71 = arith.constant 71 : index
    %254 = memref.load %arg1[%c71] : memref<81xf32, #tpu.memory_space<smem>>
    %255 = vector.broadcast %254 : f32 to vector<16x144xf32>
    %256 = arith.mulf %245, %255 : vector<16x144xf32>
    %257 = arith.addf %243, %256 : vector<16x144xf32>
    %c0_75 = arith.constant 0 : index
    %c2_76 = arith.constant 2 : index
    %c0_77 = arith.constant 0 : index
    %c0_78 = arith.constant 0 : index
    %258 = vector.load %arg3[%c0_75, %c2_76, %c0_77, %c0_78] : memref<1x3x18x146xf32, #tpu.memory_space<vmem>>, vector<1x1x16x144xf32>
    %259 = vector.shape_cast %258 : vector<1x1x16x144xf32> to vector<16x144xf32>
    %c18 = arith.constant 18 : index
    %260 = memref.load %arg1[%c18] : memref<81xf32, #tpu.memory_space<smem>>
    %261 = vector.broadcast %260 : f32 to vector<16x144xf32>
    %262 = arith.mulf %259, %261 : vector<16x144xf32>
    %263 = arith.addf %249, %262 : vector<16x144xf32>
    %c45 = arith.constant 45 : index
    %264 = memref.load %arg1[%c45] : memref<81xf32, #tpu.memory_space<smem>>
    %265 = vector.broadcast %264 : f32 to vector<16x144xf32>
    %266 = arith.mulf %259, %265 : vector<16x144xf32>
    %267 = arith.addf %253, %266 : vector<16x144xf32>
    %c72 = arith.constant 72 : index
    %268 = memref.load %arg1[%c72] : memref<81xf32, #tpu.memory_space<smem>>
    %269 = vector.broadcast %268 : f32 to vector<16x144xf32>
    %270 = arith.mulf %259, %269 : vector<16x144xf32>
    %271 = arith.addf %257, %270 : vector<16x144xf32>
    %c0_79 = arith.constant 0 : index
    %c2_80 = arith.constant 2 : index
    %c0_81 = arith.constant 0 : index
    %c1_82 = arith.constant 1 : index
    %272 = vector.load %arg3[%c0_79, %c2_80, %c0_81, %c1_82] : memref<1x3x18x146xf32, #tpu.memory_space<vmem>>, vector<1x1x16x144xf32>
    %273 = vector.shape_cast %272 : vector<1x1x16x144xf32> to vector<16x144xf32>
    %c19 = arith.constant 19 : index
    %274 = memref.load %arg1[%c19] : memref<81xf32, #tpu.memory_space<smem>>
    %275 = vector.broadcast %274 : f32 to vector<16x144xf32>
    %276 = arith.mulf %273, %275 : vector<16x144xf32>
    %277 = arith.addf %263, %276 : vector<16x144xf32>
    %c46 = arith.constant 46 : index
    %278 = memref.load %arg1[%c46] : memref<81xf32, #tpu.memory_space<smem>>
    %279 = vector.broadcast %278 : f32 to vector<16x144xf32>
    %280 = arith.mulf %273, %279 : vector<16x144xf32>
    %281 = arith.addf %267, %280 : vector<16x144xf32>
    %c73 = arith.constant 73 : index
    %282 = memref.load %arg1[%c73] : memref<81xf32, #tpu.memory_space<smem>>
    %283 = vector.broadcast %282 : f32 to vector<16x144xf32>
    %284 = arith.mulf %273, %283 : vector<16x144xf32>
    %285 = arith.addf %271, %284 : vector<16x144xf32>
    %c0_83 = arith.constant 0 : index
    %c2_84 = arith.constant 2 : index
    %c0_85 = arith.constant 0 : index
    %c2_86 = arith.constant 2 : index
    %286 = vector.load %arg3[%c0_83, %c2_84, %c0_85, %c2_86] : memref<1x3x18x146xf32, #tpu.memory_space<vmem>>, vector<1x1x16x144xf32>
    %287 = vector.shape_cast %286 : vector<1x1x16x144xf32> to vector<16x144xf32>
    %c20 = arith.constant 20 : index
    %288 = memref.load %arg1[%c20] : memref<81xf32, #tpu.memory_space<smem>>
    %289 = vector.broadcast %288 : f32 to vector<16x144xf32>
    %290 = arith.mulf %287, %289 : vector<16x144xf32>
    %291 = arith.addf %277, %290 : vector<16x144xf32>
    %c47 = arith.constant 47 : index
    %292 = memref.load %arg1[%c47] : memref<81xf32, #tpu.memory_space<smem>>
    %293 = vector.broadcast %292 : f32 to vector<16x144xf32>
    %294 = arith.mulf %287, %293 : vector<16x144xf32>
    %295 = arith.addf %281, %294 : vector<16x144xf32>
    %c74 = arith.constant 74 : index
    %296 = memref.load %arg1[%c74] : memref<81xf32, #tpu.memory_space<smem>>
    %297 = vector.broadcast %296 : f32 to vector<16x144xf32>
    %298 = arith.mulf %287, %297 : vector<16x144xf32>
    %299 = arith.addf %285, %298 : vector<16x144xf32>
    %c0_87 = arith.constant 0 : index
    %c2_88 = arith.constant 2 : index
    %c1_89 = arith.constant 1 : index
    %c0_90 = arith.constant 0 : index
    %300 = vector.load %arg3[%c0_87, %c2_88, %c1_89, %c0_90] : memref<1x3x18x146xf32, #tpu.memory_space<vmem>>, vector<1x1x16x144xf32>
    %301 = vector.shape_cast %300 : vector<1x1x16x144xf32> to vector<16x144xf32>
    %c21 = arith.constant 21 : index
    %302 = memref.load %arg1[%c21] : memref<81xf32, #tpu.memory_space<smem>>
    %303 = vector.broadcast %302 : f32 to vector<16x144xf32>
    %304 = arith.mulf %301, %303 : vector<16x144xf32>
    %305 = arith.addf %291, %304 : vector<16x144xf32>
    %c48 = arith.constant 48 : index
    %306 = memref.load %arg1[%c48] : memref<81xf32, #tpu.memory_space<smem>>
    %307 = vector.broadcast %306 : f32 to vector<16x144xf32>
    %308 = arith.mulf %301, %307 : vector<16x144xf32>
    %309 = arith.addf %295, %308 : vector<16x144xf32>
    %c75 = arith.constant 75 : index
    %310 = memref.load %arg1[%c75] : memref<81xf32, #tpu.memory_space<smem>>
    %311 = vector.broadcast %310 : f32 to vector<16x144xf32>
    %312 = arith.mulf %301, %311 : vector<16x144xf32>
    %313 = arith.addf %299, %312 : vector<16x144xf32>
    %c0_91 = arith.constant 0 : index
    %c2_92 = arith.constant 2 : index
    %c1_93 = arith.constant 1 : index
    %c1_94 = arith.constant 1 : index
    %314 = vector.load %arg3[%c0_91, %c2_92, %c1_93, %c1_94] : memref<1x3x18x146xf32, #tpu.memory_space<vmem>>, vector<1x1x16x144xf32>
    %315 = vector.shape_cast %314 : vector<1x1x16x144xf32> to vector<16x144xf32>
    %c22 = arith.constant 22 : index
    %316 = memref.load %arg1[%c22] : memref<81xf32, #tpu.memory_space<smem>>
    %317 = vector.broadcast %316 : f32 to vector<16x144xf32>
    %318 = arith.mulf %315, %317 : vector<16x144xf32>
    %319 = arith.addf %305, %318 : vector<16x144xf32>
    %c49 = arith.constant 49 : index
    %320 = memref.load %arg1[%c49] : memref<81xf32, #tpu.memory_space<smem>>
    %321 = vector.broadcast %320 : f32 to vector<16x144xf32>
    %322 = arith.mulf %315, %321 : vector<16x144xf32>
    %323 = arith.addf %309, %322 : vector<16x144xf32>
    %c76 = arith.constant 76 : index
    %324 = memref.load %arg1[%c76] : memref<81xf32, #tpu.memory_space<smem>>
    %325 = vector.broadcast %324 : f32 to vector<16x144xf32>
    %326 = arith.mulf %315, %325 : vector<16x144xf32>
    %327 = arith.addf %313, %326 : vector<16x144xf32>
    %c0_95 = arith.constant 0 : index
    %c2_96 = arith.constant 2 : index
    %c1_97 = arith.constant 1 : index
    %c2_98 = arith.constant 2 : index
    %328 = vector.load %arg3[%c0_95, %c2_96, %c1_97, %c2_98] : memref<1x3x18x146xf32, #tpu.memory_space<vmem>>, vector<1x1x16x144xf32>
    %329 = vector.shape_cast %328 : vector<1x1x16x144xf32> to vector<16x144xf32>
    %c23 = arith.constant 23 : index
    %330 = memref.load %arg1[%c23] : memref<81xf32, #tpu.memory_space<smem>>
    %331 = vector.broadcast %330 : f32 to vector<16x144xf32>
    %332 = arith.mulf %329, %331 : vector<16x144xf32>
    %333 = arith.addf %319, %332 : vector<16x144xf32>
    %c50 = arith.constant 50 : index
    %334 = memref.load %arg1[%c50] : memref<81xf32, #tpu.memory_space<smem>>
    %335 = vector.broadcast %334 : f32 to vector<16x144xf32>
    %336 = arith.mulf %329, %335 : vector<16x144xf32>
    %337 = arith.addf %323, %336 : vector<16x144xf32>
    %c77 = arith.constant 77 : index
    %338 = memref.load %arg1[%c77] : memref<81xf32, #tpu.memory_space<smem>>
    %339 = vector.broadcast %338 : f32 to vector<16x144xf32>
    %340 = arith.mulf %329, %339 : vector<16x144xf32>
    %341 = arith.addf %327, %340 : vector<16x144xf32>
    %c0_99 = arith.constant 0 : index
    %c2_100 = arith.constant 2 : index
    %c2_101 = arith.constant 2 : index
    %c0_102 = arith.constant 0 : index
    %342 = vector.load %arg3[%c0_99, %c2_100, %c2_101, %c0_102] : memref<1x3x18x146xf32, #tpu.memory_space<vmem>>, vector<1x1x16x144xf32>
    %343 = vector.shape_cast %342 : vector<1x1x16x144xf32> to vector<16x144xf32>
    %c24 = arith.constant 24 : index
    %344 = memref.load %arg1[%c24] : memref<81xf32, #tpu.memory_space<smem>>
    %345 = vector.broadcast %344 : f32 to vector<16x144xf32>
    %346 = arith.mulf %343, %345 : vector<16x144xf32>
    %347 = arith.addf %333, %346 : vector<16x144xf32>
    %c51 = arith.constant 51 : index
    %348 = memref.load %arg1[%c51] : memref<81xf32, #tpu.memory_space<smem>>
    %349 = vector.broadcast %348 : f32 to vector<16x144xf32>
    %350 = arith.mulf %343, %349 : vector<16x144xf32>
    %351 = arith.addf %337, %350 : vector<16x144xf32>
    %c78 = arith.constant 78 : index
    %352 = memref.load %arg1[%c78] : memref<81xf32, #tpu.memory_space<smem>>
    %353 = vector.broadcast %352 : f32 to vector<16x144xf32>
    %354 = arith.mulf %343, %353 : vector<16x144xf32>
    %355 = arith.addf %341, %354 : vector<16x144xf32>
    %c0_103 = arith.constant 0 : index
    %c2_104 = arith.constant 2 : index
    %c2_105 = arith.constant 2 : index
    %c1_106 = arith.constant 1 : index
    %356 = vector.load %arg3[%c0_103, %c2_104, %c2_105, %c1_106] : memref<1x3x18x146xf32, #tpu.memory_space<vmem>>, vector<1x1x16x144xf32>
    %357 = vector.shape_cast %356 : vector<1x1x16x144xf32> to vector<16x144xf32>
    %c25 = arith.constant 25 : index
    %358 = memref.load %arg1[%c25] : memref<81xf32, #tpu.memory_space<smem>>
    %359 = vector.broadcast %358 : f32 to vector<16x144xf32>
    %360 = arith.mulf %357, %359 : vector<16x144xf32>
    %361 = arith.addf %347, %360 : vector<16x144xf32>
    %c52 = arith.constant 52 : index
    %362 = memref.load %arg1[%c52] : memref<81xf32, #tpu.memory_space<smem>>
    %363 = vector.broadcast %362 : f32 to vector<16x144xf32>
    %364 = arith.mulf %357, %363 : vector<16x144xf32>
    %365 = arith.addf %351, %364 : vector<16x144xf32>
    %c79 = arith.constant 79 : index
    %366 = memref.load %arg1[%c79] : memref<81xf32, #tpu.memory_space<smem>>
    %367 = vector.broadcast %366 : f32 to vector<16x144xf32>
    %368 = arith.mulf %357, %367 : vector<16x144xf32>
    %369 = arith.addf %355, %368 : vector<16x144xf32>
    %c0_107 = arith.constant 0 : index
    %c2_108 = arith.constant 2 : index
    %c2_109 = arith.constant 2 : index
    %c2_110 = arith.constant 2 : index
    %370 = vector.load %arg3[%c0_107, %c2_108, %c2_109, %c2_110] : memref<1x3x18x146xf32, #tpu.memory_space<vmem>>, vector<1x1x16x144xf32>
    %371 = vector.shape_cast %370 : vector<1x1x16x144xf32> to vector<16x144xf32>
    %c26 = arith.constant 26 : index
    %372 = memref.load %arg1[%c26] : memref<81xf32, #tpu.memory_space<smem>>
    %373 = vector.broadcast %372 : f32 to vector<16x144xf32>
    %374 = arith.mulf %371, %373 : vector<16x144xf32>
    %375 = arith.addf %361, %374 : vector<16x144xf32>
    %c53 = arith.constant 53 : index
    %376 = memref.load %arg1[%c53] : memref<81xf32, #tpu.memory_space<smem>>
    %377 = vector.broadcast %376 : f32 to vector<16x144xf32>
    %378 = arith.mulf %371, %377 : vector<16x144xf32>
    %379 = arith.addf %365, %378 : vector<16x144xf32>
    %c80 = arith.constant 80 : index
    %380 = memref.load %arg1[%c80] : memref<81xf32, #tpu.memory_space<smem>>
    %381 = vector.broadcast %380 : f32 to vector<16x144xf32>
    %382 = arith.mulf %371, %381 : vector<16x144xf32>
    %383 = arith.addf %369, %382 : vector<16x144xf32>
    %c0_111 = arith.constant 0 : index
    %c0_112 = arith.constant 0 : index
    %c0_113 = arith.constant 0 : index
    %c0_114 = arith.constant 0 : index
    %384 = vector.load %arg4[%c0_111, %c0_112, %c0_113, %c0_114] : memref<1x3x16x144xf32, #tpu.memory_space<vmem>>, vector<1x1x16x144xf32>
    %385 = vector.shape_cast %384 : vector<1x1x16x144xf32> to vector<16x144xf32>
    %386 = vector.shape_cast %375 : vector<16x144xf32> to vector<1x1x16x144xf32>
    tpu.vector_store %arg4[%c0_111, %c0_112, %c0_113, %c0_114], %386 {strides = array<i32>} : memref<1x3x16x144xf32, #tpu.memory_space<vmem>>, vector<1x1x16x144xf32>,
    %c0_115 = arith.constant 0 : index
    %c1_116 = arith.constant 1 : index
    %c0_117 = arith.constant 0 : index
    %c0_118 = arith.constant 0 : index
    %387 = vector.load %arg4[%c0_115, %c1_116, %c0_117, %c0_118] : memref<1x3x16x144xf32, #tpu.memory_space<vmem>>, vector<1x1x16x144xf32>
    %388 = vector.shape_cast %387 : vector<1x1x16x144xf32> to vector<16x144xf32>
    %389 = vector.shape_cast %379 : vector<16x144xf32> to vector<1x1x16x144xf32>
    tpu.vector_store %arg4[%c0_115, %c1_116, %c0_117, %c0_118], %389 {strides = array<i32>} : memref<1x3x16x144xf32, #tpu.memory_space<vmem>>, vector<1x1x16x144xf32>,
    %c0_119 = arith.constant 0 : index
    %c2_120 = arith.constant 2 : index
    %c0_121 = arith.constant 0 : index
    %c0_122 = arith.constant 0 : index
    %390 = vector.load %arg4[%c0_119, %c2_120, %c0_121, %c0_122] : memref<1x3x16x144xf32, #tpu.memory_space<vmem>>, vector<1x1x16x144xf32>
    %391 = vector.shape_cast %390 : vector<1x1x16x144xf32> to vector<16x144xf32>
    %392 = vector.shape_cast %383 : vector<16x144xf32> to vector<1x1x16x144xf32>
    tpu.vector_store %arg4[%c0_119, %c2_120, %c0_121, %c0_122], %392 {strides = array<i32>} : memref<1x3x16x144xf32, #tpu.memory_space<vmem>>, vector<1x1x16x144xf32>,
    return
  }
  func.func @transform_0(%arg0: i32) -> i32 {
    %c0_i32 = arith.constant 0 : i32
    %c0_i32_0 = arith.constant 0 : i32
    return %c0_i32 : i32
  }
  func.func @transform_1(%arg0: i32) -> i32 {
    %c0_i32 = arith.constant 0 : i32
    %c0_i32_0 = arith.constant 0 : i32
    return %c0_i32 : i32
  }
  func.func @transform_2(%arg0: i32) -> (i32, i32, i32, i32) {
    %c0_i32 = arith.constant 0 : i32
    %c0_i32_0 = arith.constant 0 : i32
    %c0_i32_1 = arith.constant 0 : i32
    %c0_i32_2 = arith.constant 0 : i32
    return %arg0, %c0_i32, %c0_i32_0, %c0_i32_1 : i32, i32, i32, i32
  }
  func.func @transform_3(%arg0: i32) -> (i32, i32, i32, i32) {
    %c0_i32 = arith.constant 0 : i32
    %c0_i32_0 = arith.constant 0 : i32
    %c0_i32_1 = arith.constant 0 : i32
    %c0_i32_2 = arith.constant 0 : i32
    return %arg0, %c0_i32, %c0_i32_0, %c0_i32_1 : i32, i32, i32, i32
  }
}

</mosaic_0001>

<llo_original>
// kernel: conv2d_pallas.1
$region0: #{conv2d_pallas.1}
  #allocation0 [shape = 'u32[]', space=smem, size = 0x4, offset = 0x4, fixed_abs, tag = 'smem constant byte address 0x4 - core index']
  #allocation1 [shape = 'u32[144,128]{1,0:T(1,128)}', space=vmem, size = 0x12000, scoped, tag = 'internal scratch']
  %s0 = inlined_call_operand.vmem [shape: f32[81], index: 0, kind: input, shape index: {}]
  %s1 = inlined_call_operand.vmem [shape: f32[3], index: 1, kind: input, shape index: {}]
  %s2 = inlined_call_operand.vmem [shape: f32[2,3,18,146], index: 2, kind: input, shape index: {}]
  %s3 = inlined_call_operand.vmem [shape: f32[2,3,16,144], index: 3, kind: output, shape index: {}]
  %s4 = sld [smem:[#allocation0]]
  $region53: #{conv2d_pallas.1} parent=0
    _
  %s6 = ssub.s32 1, %s4
  %s7 = scalar_select 0, %s6, %s4
  $region1: #{conv2d_pallas.1} parent=0
    #allocation2 [shape = 'u8[512]{0}', space=smem, size = 0x200, scoped, tag = 'input window, operand 0, single buffered']
    #allocation3 [shape = 's32[2]{0}', space=sflag, size = 0x8, scoped, tag = 'scoped memory for conv2d_pallas.1']
    #allocation4 [shape = 'u8[512]{0}', space=smem, size = 0x200, scoped, tag = 'input window, operand 1, single buffered']
    #allocation5 [shape = 's32[1]{0}', space=sflag, size = 0x4, scoped, tag = 'scoped memory for conv2d_pallas.1']
    %8 = vsyncpa [#allocation3], 0
    %9 = vsyncpa [#allocation5], 0
    loop: start=0, step=1, limit=4
    $region2: #{conv2d_pallas.1} parent=1 // loop_pre_header
      _
    $region3: #{conv2d_pallas.1} parent=1 // loop_header
      %s11 = sphi 0, %s15
      %p12 = scmp.ge.s32.totalorder %s11, 4
      %s19 = sphi 0, %s19
      %s21 = sphi 0, %s19
      %s22 = sphi 0, %s21
      %s36 = sphi 0, %s22
      %s40 = sphi 0, %s40
      %s42 = sphi 0, %s40
      %s43 = sphi 0, %s42
      %s57 = sphi 0, %s43
      %s63 = sphi 0, %s65
      %s66 = sphi 0, %s63
      %s67 = sphi 0, %s66
      %s83 = sphi 0, %s67
      %s89 = sphi 0, %s91
      %s92 = sphi 0, %s89
      %s93 = sphi 0, %s92
      %s109 = sphi 0, %s93
    $region4: #{conv2d_pallas.1} parent=1 // loop_header_branch
      %14 = sbr.rel (%p12) target = $region8
    $region5: #{conv2d_pallas.1} parent=1 // loop_body
      %s16 = ssub.s32 %s11, 1
      %s17 = ssub.s32 %s11, 2
      %s18 = sadd.s32 %s11, 1
      %s20 = sadd.s32 %s19, 1
      %p23 = scmp.eq.s32.totalorder %s11, 1
      %p24 = scmp.ne.s32.totalorder %s19, %s21
      %p25 = scmp.eq.s32.totalorder %s11, 0
      %p26 = por %p24, %p25
      %p27 = scmp.ne.s32.totalorder %s19, %s21
      %p28 = scmp.eq.s32.totalorder %s16, 1
      %p29 = por %p27, %p28
      %p30 = scmp.ne.s32.totalorder %s21, %s22
      %p31 = scmp.eq.s32.totalorder %s16, 0
      %p32 = por %p30, %p31
      %p33 = scmp.ne.s32.totalorder %s21, %s22
      %p34 = scmp.eq.s32.totalorder %s17, 1
      %p35 = por %p33, %p34
      %p37 = scmp.ne.s32.totalorder %s22, %s36
      %p38 = scmp.eq.s32.totalorder %s17, 0
      %p39 = por %p37, %p38
      %s41 = sadd.s32 %s40, 1
      %p44 = scmp.eq.s32.totalorder %s11, 1
      %p45 = scmp.ne.s32.totalorder %s40, %s42
      %p46 = scmp.eq.s32.totalorder %s11, 0
      %p47 = por %p45, %p46
      %p48 = scmp.ne.s32.totalorder %s40, %s42
      %p49 = scmp.eq.s32.totalorder %s16, 1
      %p50 = por %p48, %p49
      %p51 = scmp.ne.s32.totalorder %s42, %s43
      %p52 = scmp.eq.s32.totalorder %s16, 0
      %p53 = por %p51, %p52
      %p54 = scmp.ne.s32.totalorder %s42, %s43
      %p55 = scmp.eq.s32.totalorder %s17, 1
      %p56 = por %p54, %p55
      %p58 = scmp.ne.s32.totalorder %s43, %s57
      %p59 = scmp.eq.s32.totalorder %s17, 0
      %p60 = por %p58, %p59
      %s61 = ssub.s32 %s11, %s18
      %p62 = scmp.eq.s32.totalorder %s61, 0
      %s64 = sadd.s32 %s63, 1
      %s65 = scalar_select %p62, %s63, %s64
      %p68 = pneg %p62
      %p69 = scmp.eq.s32.totalorder %s11, 1
      %p70 = por %p68, %p69
      %p71 = scmp.ne.s32.totalorder %s63, %s66
      %p72 = scmp.eq.s32.totalorder %s11, 0
      %p73 = por %p71, %p72
      %p74 = scmp.ne.s32.totalorder %s63, %s66
      %p75 = scmp.eq.s32.totalorder %s16, 1
      %p76 = por %p74, %p75
      %p77 = scmp.ne.s32.totalorder %s66, %s67
      %p78 = scmp.eq.s32.totalorder %s16, 0
      %p79 = por %p77, %p78
      %p80 = scmp.ne.s32.totalorder %s66, %s67
      %p81 = scmp.eq.s32.totalorder %s17, 1
      %p82 = por %p80, %p81
      %p84 = scmp.ne.s32.totalorder %s67, %s83
      %p85 = scmp.eq.s32.totalorder %s17, 0
      %p86 = por %p84, %p85
      %s87 = ssub.s32 %s11, %s18
      %p88 = scmp.eq.s32.totalorder %s87, 0
      %s90 = sadd.s32 %s89, 1
      %s91 = scalar_select %p88, %s89, %s90
      %p94 = pneg %p88
      %p95 = scmp.eq.s32.totalorder %s11, 1
      %p96 = por %p94, %p95
      %p97 = scmp.ne.s32.totalorder %s89, %s92
      %p98 = scmp.eq.s32.totalorder %s11, 0
      %p99 = por %p97, %p98
      %p100 = scmp.ne.s32.totalorder %s89, %s92
      %p101 = scmp.eq.s32.totalorder %s16, 1
      %p102 = por %p100, %p101
      %p103 = scmp.ne.s32.totalorder %s92, %s93
      %p104 = scmp.eq.s32.totalorder %s16, 0
      %p105 = por %p103, %p104
      %p106 = scmp.ne.s32.totalorder %s92, %s93
      %p107 = scmp.eq.s32.totalorder %s17, 1
      %p108 = por %p106, %p107
      %p110 = scmp.ne.s32.totalorder %s93, %s109
      %p111 = scmp.eq.s32.totalorder %s17, 0
      %p112 = por %p110, %p111
      %p113 = scmp.le.s32.totalorder 1, %s11
      %p114 = scmp.lt.s32.totalorder %s11, 3
      %p115 = pnand %p113, %p114
      %p116 = pneg %p115
      // Predicated region
      $region9: #{conv2d_pallas.1} parent=5 // pred_check
        _
      $region10: #{conv2d_pallas.1} parent=5 // pred_check_branch
        %118 = sbr.rel (%p115) target = $region12
      $region11: #{conv2d_pallas.1} parent=5 // pred_region
        %s119 = ssub.s32 %s11, 1
        // Predicated region
        $region13: #{conv2d_pallas.1} parent=11 // pred_check
          %p120 = pneg %p32
        $region14: #{conv2d_pallas.1} parent=11 // pred_check_branch
          %122 = sbr.rel (%p120) target = $region16
        $region15: #{conv2d_pallas.1} parent=11 // pred_region
          %s124 = ssub.s32 16, 16
          %125 = vsyncadd [#allocation3], %s124
          %s127 = sshll.u32 %s0, 4
          %s128 = int_to_ptr.vmem [resolvable:$true] %s127
          %130 = dma.vmem_to_smem %s128, 16, [#allocation2], [#allocation3]
        $region16: #{conv2d_pallas.1} parent=11 // pred_fallthru
          _
        // Predicated region
        $region17: #{conv2d_pallas.1} parent=11 // pred_check
          %p131 = pneg %p53
        $region18: #{conv2d_pallas.1} parent=11 // pred_check_branch
          %133 = sbr.rel (%p131) target = $region20
        $region19: #{conv2d_pallas.1} parent=11 // pred_region
          %s135 = ssub.s32 16, 16
          %136 = vsyncadd [#allocation5], %s135
          %s138 = sshll.u32 %s1, 4
          %s139 = int_to_ptr.vmem [resolvable:$true] %s138
          %141 = dma.vmem_to_smem %s139, 16, [#allocation4], [#allocation5]
        $region20: #{conv2d_pallas.1} parent=11 // pred_fallthru
          _
      $region12: #{conv2d_pallas.1} parent=5 // pred_fallthru
        _
      %p142 = scmp.lt.s32.totalorder %s11, 2
      // Predicated region
      $region21: #{conv2d_pallas.1} parent=5 // pred_check
        %p143 = pneg %p142
      $region22: #{conv2d_pallas.1} parent=5 // pred_check_branch
        %145 = sbr.rel (%p143) target = $region24
      $region23: #{conv2d_pallas.1} parent=5 // pred_region
        // Predicated region
        $region25: #{conv2d_pallas.1} parent=23 // pred_check
          %p146 = pneg %p73
        $region26: #{conv2d_pallas.1} parent=23 // pred_check_branch
          %148 = sbr.rel (%p146) target = $region28
        $region27: #{conv2d_pallas.1} parent=23 // pred_region
          %p149 = scmp.lt.s32.totalorder %s11, 1
          %s150 = scalar_select %p149, %s11, 1
          %s151 = smul.addr %s150, 18
          %s152 = smul.addr %s151, 8
          %s153 = scalar_lea.vmem %s2, %s152
        $region28: #{conv2d_pallas.1} parent=23 // pred_fallthru
          _
      $region24: #{conv2d_pallas.1} parent=5 // pred_fallthru
        _
      %p154 = scmp.le.s32.totalorder 1, %s11
      %p155 = scmp.lt.s32.totalorder %s11, 3
      %p156 = pnand %p154, %p155
      %p157 = pneg %p156
      // Predicated region
      $region29: #{conv2d_pallas.1} parent=5 // pred_check
        _
      $region30: #{conv2d_pallas.1} parent=5 // pred_check_branch
        %159 = sbr.rel (%p156) target = $region32
      $region31: #{conv2d_pallas.1} parent=5 // pred_region
        %s160 = ssub.s32 %s11, 1
        // Predicated region
        $region33: #{conv2d_pallas.1} parent=31 // pred_check
          %p161 = pneg %p32
        $region34: #{conv2d_pallas.1} parent=31 // pred_check_branch
          %163 = sbr.rel (%p161) target = $region36
        $region35: #{conv2d_pallas.1} parent=31 // pred_region
          %164 = dma.done [#allocation3], 16
        $region36: #{conv2d_pallas.1} parent=31 // pred_fallthru
          _
        // Predicated region
        $region37: #{conv2d_pallas.1} parent=31 // pred_check
          %p165 = pneg %p53
        $region38: #{conv2d_pallas.1} parent=31 // pred_check_branch
          %167 = sbr.rel (%p165) target = $region40
        $region39: #{conv2d_pallas.1} parent=31 // pred_region
          %168 = dma.done [#allocation5], 16
        $region40: #{conv2d_pallas.1} parent=31 // pred_fallthru
          _
        %169 = sfence
        %p170 = pneg %p32
        %p171 = pneg %p29
        %p172 = pneg %p53
        %p173 = pneg %p50
        %p174 = scmp.lt.s32.totalorder %s16, 1
        %s175 = scalar_select %p174, %s16, 1
        %s176 = smul.addr %s175, 18
        %s177 = smul.addr %s176, 8
        %s178 = scalar_lea.vmem %s2, %s177
        %p179 = pneg %p79
        %p180 = pneg %p76
        %p181 = pneg %p105
        %p182 = pneg %p102
        %p183 = scmp.lt.s32.totalorder %s16, 1
        %s184 = scalar_select %p183, %s16, 1
        %s185 = smul.addr %s184, 12
        %s186 = smul.addr %s185, 8
        %s187 = scalar_lea.vmem %s3, %s186
        %p188 = scmp.lt.s32.totalorder %s16, 1
        %s189 = scalar_select %p188, %s16, 1
        %s190 = smul.addr %s189, 18
        %s191 = smul.addr %s190, 8
        %s192 = scalar_lea.vmem %s2, %s191
        %p193 = scmp.lt.s32.totalorder %s16, 1
        %s194 = scalar_select %p193, %s16, 1
        %s195 = smul.addr %s194, 12
        %s196 = smul.addr %s195, 8
        %s197 = scalar_lea.vmem %s3, %s196
        %s198 = sld [smem:[#allocation4]]
        %v199 = vstv %s198
        %s200 = sld [smem:[#allocation4 + $0x1]]
        %v201 = vstv %s200
        %s202 = sld [smem:[#allocation4 + $0x2]]
        %v203 = vstv %s202
        %v204 = vld [vmem:[%s192] sm:$0xff]
        %v205 = vld [vmem:[%s192 + $0x8] sm:$0xff]
        %v206 = vld [vmem:[%s192 + $0x10] sm:$0xff]
        %v207 = vld [vmem:[%s192 + $0x18] sm:$0xff]
        %s208 = sld [smem:[#allocation2]]
        %v209 = vstv %s208
        %v210 = vmul.f32 %v204, %v209
        %v211 = vmul.f32 %v205, %v209
        %v212 = vmul.f32 %v206, %v209
        %v213 = vmul.f32 %v207, %v209
        %v214 = vadd.f32 %v199, %v210
        %v215 = vadd.f32 %v199, %v211
        %v216 = vadd.f32 %v199, %v212
        %v217 = vadd.f32 %v199, %v213
        %s218 = sld [smem:[#allocation2 + $0x1b]]
        %v219 = vstv %s218
        %v220 = vmul.f32 %v204, %v219
        %v221 = vmul.f32 %v205, %v219
        %v222 = vmul.f32 %v206, %v219
        %v223 = vmul.f32 %v207, %v219
        %v224 = vadd.f32 %v201, %v220
        %v225 = vadd.f32 %v201, %v221
        %v226 = vadd.f32 %v201, %v222
        %v227 = vadd.f32 %v201, %v223
        %s228 = sld [smem:[#allocation2 + $0x36]]
        %v229 = vstv %s228
        %v230 = vmul.f32 %v204, %v229
        %v231 = vmul.f32 %v205, %v229
        %v232 = vmul.f32 %v206, %v229
        %v233 = vmul.f32 %v207, %v229
        %v234 = vadd.f32 %v203, %v230
        %v235 = vadd.f32 %v203, %v231
        %v236 = vadd.f32 %v203, %v232
        %v237 = vadd.f32 %v203, %v233
        %s238 = sld [smem:[#allocation2 + $0x1]]
        %v239 = vstv %s238
        %v240 = vmul.f32 %v204, %v239
        %v241 = vmul.f32 %v205, %v239
        %v242 = vmul.f32 %v206, %v239
        %v243 = vmul.f32 %v207, %v239
        %248 = vrot.lane.b32.xlu0 %v240, 127
        %v249 = vpop.permute.xlu0 %248
        %250 = vrot.lane.b32.xlu0 %v241, 127
        %v251 = vpop.permute.xlu0 %250
        %252 = vrot.lane.b32.xlu0 %v242, 127
        %v253 = vpop.permute.xlu0 %252
        %254 = vrot.lane.b32.xlu0 %v243, 127
        %v255 = vpop.permute.xlu0 %254
        %vm256 = vcmask 1039360
        %v257 = vsel %vm256, %v249, %v251
        %v258 = vsel %vm256, %v253, %v255
        %v263 = vadd.f32 %v214, %v257
        %v264 = vadd.f32 %v215, %v251
        %v265 = vadd.f32 %v216, %v258
        %v266 = vadd.f32 %v217, %v255
        %s267 = sld [smem:[#allocation2 + $0x1c]]
        %v268 = vstv %s267
        %v269 = vmul.f32 %v204, %v268
        %v270 = vmul.f32 %v205, %v268
        %v271 = vmul.f32 %v206, %v268
        %v272 = vmul.f32 %v207, %v268
        %277 = vrot.lane.b32.xlu0 %v269, 127
        %v278 = vpop.permute.xlu0 %277
        %279 = vrot.lane.b32.xlu0 %v270, 127
        %v280 = vpop.permute.xlu0 %279
        %281 = vrot.lane.b32.xlu0 %v271, 127
        %v282 = vpop.permute.xlu0 %281
        %283 = vrot.lane.b32.xlu0 %v272, 127
        %v284 = vpop.permute.xlu0 %283
        %v285 = vsel %vm256, %v278, %v280
        %v286 = vsel %vm256, %v282, %v284
        %v291 = vadd.f32 %v224, %v285
        %v292 = vadd.f32 %v225, %v280
        %v293 = vadd.f32 %v226, %v286
        %v294 = vadd.f32 %v227, %v284
        %s295 = sld [smem:[#allocation2 + $0x37]]
        %v296 = vstv %s295
        %v297 = vmul.f32 %v204, %v296
        %v298 = vmul.f32 %v205, %v296
        %v299 = vmul.f32 %v206, %v296
        %v300 = vmul.f32 %v207, %v296
        %305 = vrot.lane.b32.xlu0 %v297, 127
        %v306 = vpop.permute.xlu0 %305
        %307 = vrot.lane.b32.xlu0 %v298, 127
        %v308 = vpop.permute.xlu0 %307
        %309 = vrot.lane.b32.xlu0 %v299, 127
        %v310 = vpop.permute.xlu0 %309
        %311 = vrot.lane.b32.xlu0 %v300, 127
        %v312 = vpop.permute.xlu0 %311
        %v313 = vsel %vm256, %v306, %v308
        %v314 = vsel %vm256, %v310, %v312
        %v319 = vadd.f32 %v234, %v313
        %v320 = vadd.f32 %v235, %v308
        %v321 = vadd.f32 %v236, %v314
        %v322 = vadd.f32 %v237, %v312
        %s323 = sld [smem:[#allocation2 + $0x2]]
        %v324 = vstv %s323
        %v325 = vmul.f32 %v204, %v324
        %v326 = vmul.f32 %v205, %v324
        %v327 = vmul.f32 %v206, %v324
        %v328 = vmul.f32 %v207, %v324
        %333 = vrot.lane.b32.xlu0 %v325, 126
        %v334 = vpop.permute.xlu0 %333
        %335 = vrot.lane.b32.xlu0 %v326, 126
        %v336 = vpop.permute.xlu0 %335
        %337 = vrot.lane.b32.xlu0 %v327, 126
        %v338 = vpop.permute.xlu0 %337
        %339 = vrot.lane.b32.xlu0 %v328, 126
        %v340 = vpop.permute.xlu0 %339
        %vm341 = vcmask 1031168
        %v342 = vsel %vm341, %v334, %v336
        %v343 = vsel %vm341, %v338, %v340
        %v348 = vadd.f32 %v263, %v342
        %v349 = vadd.f32 %v264, %v336
        %v350 = vadd.f32 %v265, %v343
        %v351 = vadd.f32 %v266, %v340
        %s352 = sld [smem:[#allocation2 + $0x1d]]
        %v353 = vstv %s352
        %v354 = vmul.f32 %v204, %v353
        %v355 = vmul.f32 %v205, %v353
        %v356 = vmul.f32 %v206, %v353
        %v357 = vmul.f32 %v207, %v353
        %362 = vrot.lane.b32.xlu0 %v354, 126
        %v363 = vpop.permute.xlu0 %362
        %364 = vrot.lane.b32.xlu0 %v355, 126
        %v365 = vpop.permute.xlu0 %364
        %366 = vrot.lane.b32.xlu0 %v356, 126
        %v367 = vpop.permute.xlu0 %366
        %368 = vrot.lane.b32.xlu0 %v357, 126
        %v369 = vpop.permute.xlu0 %368
        %v370 = vsel %vm341, %v363, %v365
        %v371 = vsel %vm341, %v367, %v369
        %v376 = vadd.f32 %v291, %v370
        %v377 = vadd.f32 %v292, %v365
        %v378 = vadd.f32 %v293, %v371
        %v379 = vadd.f32 %v294, %v369
        %s380 = sld [smem:[#allocation2 + $0x38]]
        %v381 = vstv %s380
        %v382 = vmul.f32 %v204, %v381
        %v383 = vmul.f32 %v205, %v381
        %v384 = vmul.f32 %v206, %v381
        %v385 = vmul.f32 %v207, %v381
        %390 = vrot.lane.b32.xlu0 %v382, 126
        %v391 = vpop.permute.xlu0 %390
        %392 = vrot.lane.b32.xlu0 %v383, 126
        %v393 = vpop.permute.xlu0 %392
        %394 = vrot.lane.b32.xlu0 %v384, 126
        %v395 = vpop.permute.xlu0 %394
        %396 = vrot.lane.b32.xlu0 %v385, 126
        %v397 = vpop.permute.xlu0 %396
        %v398 = vsel %vm341, %v391, %v393
        %v399 = vsel %vm341, %v395, %v397
        %v404 = vadd.f32 %v319, %v398
        %v405 = vadd.f32 %v320, %v393
        %v406 = vadd.f32 %v321, %v399
        %v407 = vadd.f32 %v322, %v397
        %v408 = vld [vmem:[%s192] sm:$0xfe]
        %v409 = vld [vmem:[%s192 + $0x8] sm:$0xfe]
        %v410 = vld [vmem:[%s192 + $0x10] sm:$0xff]
        %v411 = vld [vmem:[%s192 + $0x18] sm:$0xff]
        %v412 = vld [vmem:[%s192 + $0x20] sm:$0x1]
        %v413 = vld [vmem:[%s192 + $0x28] sm:$0x1]
        %s414 = sld [smem:[#allocation2 + $0x3]]
        %v415 = vstv %s414
        %v416 = vmul.f32 %v408, %v415
        %v417 = vmul.f32 %v409, %v415
        %v418 = vmul.f32 %v410, %v415
        %v419 = vmul.f32 %v411, %v415
        %v420 = vmul.f32 %v412, %v415
        %v421 = vmul.f32 %v413, %v415
        %vm428 = vcmask 1046528
        %v429 = vrot.slane %v416, 1
        %v430 = vrot.slane %v418, 1
        %v431 = vsel %vm428, %v429, %v430
        %v432 = vrot.slane %v417, 1
        %v433 = vrot.slane %v419, 1
        %v434 = vsel %vm428, %v432, %v433
        %v435 = vrot.slane %v420, 1
        %v436 = vsel %vm428, %v430, %v435
        %v437 = vrot.slane %v421, 1
        %v438 = vsel %vm428, %v433, %v437
        %v443 = vadd.f32 %v348, %v431
        %v444 = vadd.f32 %v349, %v434
        %v445 = vadd.f32 %v350, %v436
        %v446 = vadd.f32 %v351, %v438
        %s447 = sld [smem:[#allocation2 + $0x1e]]
        %v448 = vstv %s447
        %v449 = vmul.f32 %v408, %v448
        %v450 = vmul.f32 %v409, %v448
        %v451 = vmul.f32 %v410, %v448
        %v452 = vmul.f32 %v411, %v448
        %v453 = vmul.f32 %v412, %v448
        %v454 = vmul.f32 %v413, %v448
        %v461 = vrot.slane %v449, 1
        %v462 = vrot.slane %v451, 1
        %v463 = vsel %vm428, %v461, %v462
        %v464 = vrot.slane %v450, 1
        %v465 = vrot.slane %v452, 1
        %v466 = vsel %vm428, %v464, %v465
        %v467 = vrot.slane %v453, 1
        %v468 = vsel %vm428, %v462, %v467
        %v469 = vrot.slane %v454, 1
        %v470 = vsel %vm428, %v465, %v469
        %v475 = vadd.f32 %v376, %v463
        %v476 = vadd.f32 %v377, %v466
        %v477 = vadd.f32 %v378, %v468
        %v478 = vadd.f32 %v379, %v470
        %s479 = sld [smem:[#allocation2 + $0x39]]
        %v480 = vstv %s479
        %v481 = vmul.f32 %v408, %v480
        %v482 = vmul.f32 %v409, %v480
        %v483 = vmul.f32 %v410, %v480
        %v484 = vmul.f32 %v411, %v480
        %v485 = vmul.f32 %v412, %v480
        %v486 = vmul.f32 %v413, %v480
        %v493 = vrot.slane %v481, 1
        %v494 = vrot.slane %v483, 1
        %v495 = vsel %vm428, %v493, %v494
        %v496 = vrot.slane %v482, 1
        %v497 = vrot.slane %v484, 1
        %v498 = vsel %vm428, %v496, %v497
        %v499 = vrot.slane %v485, 1
        %v500 = vsel %vm428, %v494, %v499
        %v501 = vrot.slane %v486, 1
        %v502 = vsel %vm428, %v497, %v501
        %v507 = vadd.f32 %v404, %v495
        %v508 = vadd.f32 %v405, %v498
        %v509 = vadd.f32 %v406, %v500
        %v510 = vadd.f32 %v407, %v502
        %s511 = sld [smem:[#allocation2 + $0x4]]
        %v512 = vstv %s511
        %v513 = vmul.f32 %v408, %v512
        %v514 = vmul.f32 %v409, %v512
        %v515 = vmul.f32 %v410, %v512
        %v516 = vmul.f32 %v411, %v512
        %v517 = vmul.f32 %v412, %v512
        %v518 = vmul.f32 %v413, %v512
        %v525 = vrot.slane %v513, 1
        %v526 = vrot.slane %v515, 1
        %v527 = vsel %vm428, %v525, %v526
        %v528 = vrot.slane %v514, 1
        %v529 = vrot.slane %v516, 1
        %v530 = vsel %vm428, %v528, %v529
        %v531 = vrot.slane %v517, 1
        %v532 = vsel %vm428, %v526, %v531
        %v533 = vrot.slane %v518, 1
        %v534 = vsel %vm428, %v529, %v533
        %535 = vrot.lane.b32.xlu0 %v527, 127
        %v536 = vpop.permute.xlu0 %535
        %537 = vrot.lane.b32.xlu0 %v530, 127
        %v538 = vpop.permute.xlu0 %537
        %539 = vrot.lane.b32.xlu0 %v532, 127
        %v540 = vpop.permute.xlu0 %539
        %541 = vrot.lane.b32.xlu0 %v534, 127
        %v542 = vpop.permute.xlu0 %541
        %v543 = vsel %vm256, %v536, %v538
        %v544 = vsel %vm256, %v540, %v542
        %v549 = vadd.f32 %v443, %v543
        %v550 = vadd.f32 %v444, %v538
        %v551 = vadd.f32 %v445, %v544
        %v552 = vadd.f32 %v446, %v542
        %s553 = sld [smem:[#allocation2 + $0x1f]]
        %v554 = vstv %s553
        %v555 = vmul.f32 %v408, %v554
        %v556 = vmul.f32 %v409, %v554
        %v557 = vmul.f32 %v410, %v554
        %v558 = vmul.f32 %v411, %v554
        %v559 = vmul.f32 %v412, %v554
        %v560 = vmul.f32 %v413, %v554
        %v567 = vrot.slane %v555, 1
        %v568 = vrot.slane %v557, 1
        %v569 = vsel %vm428, %v567, %v568
        %v570 = vrot.slane %v556, 1
        %v571 = vrot.slane %v558, 1
        %v572 = vsel %vm428, %v570, %v571
        %v573 = vrot.slane %v559, 1
        %v574 = vsel %vm428, %v568, %v573
        %v575 = vrot.slane %v560, 1
        %v576 = vsel %vm428, %v571, %v575
        %577 = vrot.lane.b32.xlu0 %v569, 127
        %v578 = vpop.permute.xlu0 %577
        %579 = vrot.lane.b32.xlu0 %v572, 127
        %v580 = vpop.permute.xlu0 %579
        %581 = vrot.lane.b32.xlu0 %v574, 127
        %v582 = vpop.permute.xlu0 %581
        %583 = vrot.lane.b32.xlu0 %v576, 127
        %v584 = vpop.permute.xlu0 %583
        %v585 = vsel %vm256, %v578, %v580
        %v586 = vsel %vm256, %v582, %v584
        %v591 = vadd.f32 %v475, %v585
        %v592 = vadd.f32 %v476, %v580
        %v593 = vadd.f32 %v477, %v586
        %v594 = vadd.f32 %v478, %v584
        %s595 = sld [smem:[#allocation2 + $0x3a]]
        %v596 = vstv %s595
        %v597 = vmul.f32 %v408, %v596
        %v598 = vmul.f32 %v409, %v596
        %v599 = vmul.f32 %v410, %v596
        %v600 = vmul.f32 %v411, %v596
        %v601 = vmul.f32 %v412, %v596
        %v602 = vmul.f32 %v413, %v596
        %v609 = vrot.slane %v597, 1
        %v610 = vrot.slane %v599, 1
        %v611 = vsel %vm428, %v609, %v610
        %v612 = vrot.slane %v598, 1
        %v613 = vrot.slane %v600, 1
        %v614 = vsel %vm428, %v612, %v613
        %v615 = vrot.slane %v601, 1
        %v616 = vsel %vm428, %v610, %v615
        %v617 = vrot.slane %v602, 1
        %v618 = vsel %vm428, %v613, %v617
        %619 = vrot.lane.b32.xlu0 %v611, 127
        %v620 = vpop.permute.xlu0 %619
        %621 = vrot.lane.b32.xlu0 %v614, 127
        %v622 = vpop.permute.xlu0 %621
        %623 = vrot.lane.b32.xlu0 %v616, 127
        %v624 = vpop.permute.xlu0 %623
        %625 = vrot.lane.b32.xlu0 %v618, 127
        %v626 = vpop.permute.xlu0 %625
        %v627 = vsel %vm256, %v620, %v622
        %v628 = vsel %vm256, %v624, %v626
        %v633 = vadd.f32 %v507, %v627
        %v634 = vadd.f32 %v508, %v622
        %v635 = vadd.f32 %v509, %v628
        %v636 = vadd.f32 %v510, %v626
        %s637 = sld [smem:[#allocation2 + $0x5]]
        %v638 = vstv %s637
        %v639 = vmul.f32 %v408, %v638
        %v640 = vmul.f32 %v409, %v638
        %v641 = vmul.f32 %v410, %v638
        %v642 = vmul.f32 %v411, %v638
        %v643 = vmul.f32 %v412, %v638
        %v644 = vmul.f32 %v413, %v638
        %v651 = vrot.slane %v639, 1
        %v652 = vrot.slane %v641, 1
        %v653 = vsel %vm428, %v651, %v652
        %v654 = vrot.slane %v640, 1
        %v655 = vrot.slane %v642, 1
        %v656 = vsel %vm428, %v654, %v655
        %v657 = vrot.slane %v643, 1
        %v658 = vsel %vm428, %v652, %v657
        %v659 = vrot.slane %v644, 1
        %v660 = vsel %vm428, %v655, %v659
        %661 = vrot.lane.b32.xlu0 %v653, 126
        %v662 = vpop.permute.xlu0 %661
        %663 = vrot.lane.b32.xlu0 %v656, 126
        %v664 = vpop.permute.xlu0 %663
        %665 = vrot.lane.b32.xlu0 %v658, 126
        %v666 = vpop.permute.xlu0 %665
        %667 = vrot.lane.b32.xlu0 %v660, 126
        %v668 = vpop.permute.xlu0 %667
        %v669 = vsel %vm341, %v662, %v664
        %v670 = vsel %vm341, %v666, %v668
        %v675 = vadd.f32 %v549, %v669
        %v676 = vadd.f32 %v550, %v664
        %v677 = vadd.f32 %v551, %v670
        %v678 = vadd.f32 %v552, %v668
        %s679 = sld [smem:[#allocation2 + $0x20]]
        %v680 = vstv %s679
        %v681 = vmul.f32 %v408, %v680
        %v682 = vmul.f32 %v409, %v680
        %v683 = vmul.f32 %v410, %v680
        %v684 = vmul.f32 %v411, %v680
        %v685 = vmul.f32 %v412, %v680
        %v686 = vmul.f32 %v413, %v680
        %v693 = vrot.slane %v681, 1
        %v694 = vrot.slane %v683, 1
        %v695 = vsel %vm428, %v693, %v694
        %v696 = vrot.slane %v682, 1
        %v697 = vrot.slane %v684, 1
        %v698 = vsel %vm428, %v696, %v697
        %v699 = vrot.slane %v685, 1
        %v700 = vsel %vm428, %v694, %v699
        %v701 = vrot.slane %v686, 1
        %v702 = vsel %vm428, %v697, %v701
        %703 = vrot.lane.b32.xlu0 %v695, 126
        %v704 = vpop.permute.xlu0 %703
        %705 = vrot.lane.b32.xlu0 %v698, 126
        %v706 = vpop.permute.xlu0 %705
        %707 = vrot.lane.b32.xlu0 %v700, 126
        %v708 = vpop.permute.xlu0 %707
        %709 = vrot.lane.b32.xlu0 %v702, 126
        %v710 = vpop.permute.xlu0 %709
        %v711 = vsel %vm341, %v704, %v706
        %v712 = vsel %vm341, %v708, %v710
        %v717 = vadd.f32 %v591, %v711
        %v718 = vadd.f32 %v592, %v706
        %v719 = vadd.f32 %v593, %v712
        %v720 = vadd.f32 %v594, %v710
        %s721 = sld [smem:[#allocation2 + $0x3b]]
        %v722 = vstv %s721
        %v723 = vmul.f32 %v408, %v722
        %v724 = vmul.f32 %v409, %v722
        %v725 = vmul.f32 %v410, %v722
        %v726 = vmul.f32 %v411, %v722
        %v727 = vmul.f32 %v412, %v722
        %v728 = vmul.f32 %v413, %v722
        %v735 = vrot.slane %v723, 1
        %v736 = vrot.slane %v725, 1
        %v737 = vsel %vm428, %v735, %v736
        %v738 = vrot.slane %v724, 1
        %v739 = vrot.slane %v726, 1
        %v740 = vsel %vm428, %v738, %v739
        %v741 = vrot.slane %v727, 1
        %v742 = vsel %vm428, %v736, %v741
        %v743 = vrot.slane %v728, 1
        %v744 = vsel %vm428, %v739, %v743
        %745 = vrot.lane.b32.xlu0 %v737, 126
        %v746 = vpop.permute.xlu0 %745
        %747 = vrot.lane.b32.xlu0 %v740, 126
        %v748 = vpop.permute.xlu0 %747
        %749 = vrot.lane.b32.xlu0 %v742, 126
        %v750 = vpop.permute.xlu0 %749
        %751 = vrot.lane.b32.xlu0 %v744, 126
        %v752 = vpop.permute.xlu0 %751
        %v753 = vsel %vm341, %v746, %v748
        %v754 = vsel %vm341, %v750, %v752
        %v759 = vadd.f32 %v633, %v753
        %v760 = vadd.f32 %v634, %v748
        %v761 = vadd.f32 %v635, %v754
        %v762 = vadd.f32 %v636, %v752
        %v763 = vld [vmem:[%s192] sm:$0xfc]
        %v764 = vld [vmem:[%s192 + $0x8] sm:$0xfc]
        %v765 = vld [vmem:[%s192 + $0x20] sm:$0x3]
        %v766 = vld [vmem:[%s192 + $0x28] sm:$0x3]
        %s767 = sld [smem:[#allocation2 + $0x6]]
        %v768 = vstv %s767
        %v769 = vmul.f32 %v763, %v768
        %v770 = vmul.f32 %v764, %v768
        %v771 = vmul.f32 %v410, %v768
        %v772 = vmul.f32 %v411, %v768
        %v773 = vmul.f32 %v765, %v768
        %v774 = vmul.f32 %v766, %v768
        %vm781 = vcmask 1045504
        %v782 = vrot.slane %v769, 2
        %v783 = vrot.slane %v771, 2
        %v784 = vsel %vm781, %v782, %v783
        %v785 = vrot.slane %v770, 2
        %v786 = vrot.slane %v772, 2
        %v787 = vsel %vm781, %v785, %v786
        %v788 = vrot.slane %v773, 2
        %v789 = vsel %vm781, %v783, %v788
        %v790 = vrot.slane %v774, 2
        %v791 = vsel %vm781, %v786, %v790
        %v796 = vadd.f32 %v675, %v784
        %v797 = vadd.f32 %v676, %v787
        %v798 = vadd.f32 %v677, %v789
        %v799 = vadd.f32 %v678, %v791
        %s800 = sld [smem:[#allocation2 + $0x21]]
        %v801 = vstv %s800
        %v802 = vmul.f32 %v763, %v801
        %v803 = vmul.f32 %v764, %v801
        %v804 = vmul.f32 %v410, %v801
        %v805 = vmul.f32 %v411, %v801
        %v806 = vmul.f32 %v765, %v801
        %v807 = vmul.f32 %v766, %v801
        %v814 = vrot.slane %v802, 2
        %v815 = vrot.slane %v804, 2
        %v816 = vsel %vm781, %v814, %v815
        %v817 = vrot.slane %v803, 2
        %v818 = vrot.slane %v805, 2
        %v819 = vsel %vm781, %v817, %v818
        %v820 = vrot.slane %v806, 2
        %v821 = vsel %vm781, %v815, %v820
        %v822 = vrot.slane %v807, 2
        %v823 = vsel %vm781, %v818, %v822
        %v828 = vadd.f32 %v717, %v816
        %v829 = vadd.f32 %v718, %v819
        %v830 = vadd.f32 %v719, %v821
        %v831 = vadd.f32 %v720, %v823
        %s832 = sld [smem:[#allocation2 + $0x3c]]
        %v833 = vstv %s832
        %v834 = vmul.f32 %v763, %v833
        %v835 = vmul.f32 %v764, %v833
        %v836 = vmul.f32 %v410, %v833
        %v837 = vmul.f32 %v411, %v833
        %v838 = vmul.f32 %v765, %v833
        %v839 = vmul.f32 %v766, %v833
        %v846 = vrot.slane %v834, 2
        %v847 = vrot.slane %v836, 2
        %v848 = vsel %vm781, %v846, %v847
        %v849 = vrot.slane %v835, 2
        %v850 = vrot.slane %v837, 2
        %v851 = vsel %vm781, %v849, %v850
        %v852 = vrot.slane %v838, 2
        %v853 = vsel %vm781, %v847, %v852
        %v854 = vrot.slane %v839, 2
        %v855 = vsel %vm781, %v850, %v854
        %v860 = vadd.f32 %v759, %v848
        %v861 = vadd.f32 %v760, %v851
        %v862 = vadd.f32 %v761, %v853
        %v863 = vadd.f32 %v762, %v855
        %s864 = sld [smem:[#allocation2 + $0x7]]
        %v865 = vstv %s864
        %v866 = vmul.f32 %v763, %v865
        %v867 = vmul.f32 %v764, %v865
        %v868 = vmul.f32 %v410, %v865
        %v869 = vmul.f32 %v411, %v865
        %v870 = vmul.f32 %v765, %v865
        %v871 = vmul.f32 %v766, %v865
        %v878 = vrot.slane %v866, 2
        %v879 = vrot.slane %v868, 2
        %v880 = vsel %vm781, %v878, %v879
        %v881 = vrot.slane %v867, 2
        %v882 = vrot.slane %v869, 2
        %v883 = vsel %vm781, %v881, %v882
        %v884 = vrot.slane %v870, 2
        %v885 = vsel %vm781, %v879, %v884
        %v886 = vrot.slane %v871, 2
        %v887 = vsel %vm781, %v882, %v886
        %888 = vrot.lane.b32.xlu0 %v880, 127
        %v889 = vpop.permute.xlu0 %888
        %890 = vrot.lane.b32.xlu0 %v883, 127
        %v891 = vpop.permute.xlu0 %890
        %892 = vrot.lane.b32.xlu0 %v885, 127
        %v893 = vpop.permute.xlu0 %892
        %894 = vrot.lane.b32.xlu0 %v887, 127
        %v895 = vpop.permute.xlu0 %894
        %v896 = vsel %vm256, %v889, %v891
        %v897 = vsel %vm256, %v893, %v895
        %v902 = vadd.f32 %v796, %v896
        %v903 = vadd.f32 %v797, %v891
        %v904 = vadd.f32 %v798, %v897
        %v905 = vadd.f32 %v799, %v895
        %s906 = sld [smem:[#allocation2 + $0x22]]
        %v907 = vstv %s906
        %v908 = vmul.f32 %v763, %v907
        %v909 = vmul.f32 %v764, %v907
        %v910 = vmul.f32 %v410, %v907
        %v911 = vmul.f32 %v411, %v907
        %v912 = vmul.f32 %v765, %v907
        %v913 = vmul.f32 %v766, %v907
        %v920 = vrot.slane %v908, 2
        %v921 = vrot.slane %v910, 2
        %v922 = vsel %vm781, %v920, %v921
        %v923 = vrot.slane %v909, 2
        %v924 = vrot.slane %v911, 2
        %v925 = vsel %vm781, %v923, %v924
        %v926 = vrot.slane %v912, 2
        %v927 = vsel %vm781, %v921, %v926
        %v928 = vrot.slane %v913, 2
        %v929 = vsel %vm781, %v924, %v928
        %930 = vrot.lane.b32.xlu0 %v922, 127
        %v931 = vpop.permute.xlu0 %930
        %932 = vrot.lane.b32.xlu0 %v925, 127
        %v933 = vpop.permute.xlu0 %932
        %934 = vrot.lane.b32.xlu0 %v927, 127
        %v935 = vpop.permute.xlu0 %934
        %936 = vrot.lane.b32.xlu0 %v929, 127
        %v937 = vpop.permute.xlu0 %936
        %v938 = vsel %vm256, %v931, %v933
        %v939 = vsel %vm256, %v935, %v937
        %v944 = vadd.f32 %v828, %v938
        %v945 = vadd.f32 %v829, %v933
        %v946 = vadd.f32 %v830, %v939
        %v947 = vadd.f32 %v831, %v937
        %s948 = sld [smem:[#allocation2 + $0x3d]]
        %v949 = vstv %s948
        %v950 = vmul.f32 %v763, %v949
        %v951 = vmul.f32 %v764, %v949
        %v952 = vmul.f32 %v410, %v949
        %v953 = vmul.f32 %v411, %v949
        %v954 = vmul.f32 %v765, %v949
        %v955 = vmul.f32 %v766, %v949
        %v962 = vrot.slane %v950, 2
        %v963 = vrot.slane %v952, 2
        %v964 = vsel %vm781, %v962, %v963
        %v965 = vrot.slane %v951, 2
        %v966 = vrot.slane %v953, 2
        %v967 = vsel %vm781, %v965, %v966
        %v968 = vrot.slane %v954, 2
        %v969 = vsel %vm781, %v963, %v968
        %v970 = vrot.slane %v955, 2
        %v971 = vsel %vm781, %v966, %v970
        %972 = vrot.lane.b32.xlu0 %v964, 127
        %v973 = vpop.permute.xlu0 %972
        %974 = vrot.lane.b32.xlu0 %v967, 127
        %v975 = vpop.permute.xlu0 %974
        %976 = vrot.lane.b32.xlu0 %v969, 127
        %v977 = vpop.permute.xlu0 %976
        %978 = vrot.lane.b32.xlu0 %v971, 127
        %v979 = vpop.permute.xlu0 %978
        %v980 = vsel %vm256, %v973, %v975
        %v981 = vsel %vm256, %v977, %v979
        %v986 = vadd.f32 %v860, %v980
        %v987 = vadd.f32 %v861, %v975
        %v988 = vadd.f32 %v862, %v981
        %v989 = vadd.f32 %v863, %v979
        %s990 = sld [smem:[#allocation2 + $0x8]]
        %v991 = vstv %s990
        %v992 = vmul.f32 %v763, %v991
        %v993 = vmul.f32 %v764, %v991
        %v994 = vmul.f32 %v410, %v991
        %v995 = vmul.f32 %v411, %v991
        %v996 = vmul.f32 %v765, %v991
        %v997 = vmul.f32 %v766, %v991
        %v1004 = vrot.slane %v992, 2
        %v1005 = vrot.slane %v994, 2
        %v1006 = vsel %vm781, %v1004, %v1005
        %v1007 = vrot.slane %v993, 2
        %v1008 = vrot.slane %v995, 2
        %v1009 = vsel %vm781, %v1007, %v1008
        %v1010 = vrot.slane %v996, 2
        %v1011 = vsel %vm781, %v1005, %v1010
        %v1012 = vrot.slane %v997, 2
        %v1013 = vsel %vm781, %v1008, %v1012
        %1014 = vrot.lane.b32.xlu0 %v1006, 126
        %v1015 = vpop.permute.xlu0 %1014
        %1016 = vrot.lane.b32.xlu0 %v1009, 126
        %v1017 = vpop.permute.xlu0 %1016
        %1018 = vrot.lane.b32.xlu0 %v1011, 126
        %v1019 = vpop.permute.xlu0 %1018
        %1020 = vrot.lane.b32.xlu0 %v1013, 126
        %v1021 = vpop.permute.xlu0 %1020
        %v1022 = vsel %vm341, %v1015, %v1017
        %v1023 = vsel %vm341, %v1019, %v1021
        %v1028 = vadd.f32 %v902, %v1022
        %v1029 = vadd.f32 %v903, %v1017
        %v1030 = vadd.f32 %v904, %v1023
        %v1031 = vadd.f32 %v905, %v1021
        %s1032 = sld [smem:[#allocation2 + $0x23]]
        %v1033 = vstv %s1032
        %v1034 = vmul.f32 %v763, %v1033
        %v1035 = vmul.f32 %v764, %v1033
        %v1036 = vmul.f32 %v410, %v1033
        %v1037 = vmul.f32 %v411, %v1033
        %v1038 = vmul.f32 %v765, %v1033
        %v1039 = vmul.f32 %v766, %v1033
        %v1046 = vrot.slane %v1034, 2
        %v1047 = vrot.slane %v1036, 2
        %v1048 = vsel %vm781, %v1046, %v1047
        %v1049 = vrot.slane %v1035, 2
        %v1050 = vrot.slane %v1037, 2
        %v1051 = vsel %vm781, %v1049, %v1050
        %v1052 = vrot.slane %v1038, 2
        %v1053 = vsel %vm781, %v1047, %v1052
        %v1054 = vrot.slane %v1039, 2
        %v1055 = vsel %vm781, %v1050, %v1054
        %1056 = vrot.lane.b32.xlu0 %v1048, 126
        %v1057 = vpop.permute.xlu0 %1056
        %1058 = vrot.lane.b32.xlu0 %v1051, 126
        %v1059 = vpop.permute.xlu0 %1058
        %1060 = vrot.lane.b32.xlu0 %v1053, 126
        %v1061 = vpop.permute.xlu0 %1060
        %1062 = vrot.lane.b32.xlu0 %v1055, 126
        %v1063 = vpop.permute.xlu0 %1062
        %v1064 = vsel %vm341, %v1057, %v1059
        %v1065 = vsel %vm341, %v1061, %v1063
        %v1070 = vadd.f32 %v944, %v1064
        %v1071 = vadd.f32 %v945, %v1059
        %v1072 = vadd.f32 %v946, %v1065
        %v1073 = vadd.f32 %v947, %v1063
        %s1074 = sld [smem:[#allocation2 + $0x3e]]
        %v1075 = vstv %s1074
        %v1076 = vmul.f32 %v763, %v1075
        %v1077 = vmul.f32 %v764, %v1075
        %v1078 = vmul.f32 %v410, %v1075
        %v1079 = vmul.f32 %v411, %v1075
        %v1080 = vmul.f32 %v765, %v1075
        %v1081 = vmul.f32 %v766, %v1075
        %v1088 = vrot.slane %v1076, 2
        %v1089 = vrot.slane %v1078, 2
        %v1090 = vsel %vm781, %v1088, %v1089
        %v1091 = vrot.slane %v1077, 2
        %v1092 = vrot.slane %v1079, 2
        %v1093 = vsel %vm781, %v1091, %v1092
        %v1094 = vrot.slane %v1080, 2
        %v1095 = vsel %vm781, %v1089, %v1094
        %v1096 = vrot.slane %v1081, 2
        %v1097 = vsel %vm781, %v1092, %v1096
        %1098 = vrot.lane.b32.xlu0 %v1090, 126
        %v1099 = vpop.permute.xlu0 %1098
        %1100 = vrot.lane.b32.xlu0 %v1093, 126
        %v1101 = vpop.permute.xlu0 %1100
        %1102 = vrot.lane.b32.xlu0 %v1095, 126
        %v1103 = vpop.permute.xlu0 %1102
        %1104 = vrot.lane.b32.xlu0 %v1097, 126
        %v1105 = vpop.permute.xlu0 %1104
        %v1106 = vsel %vm341, %v1099, %v1101
        %v1107 = vsel %vm341, %v1103, %v1105
        %v1112 = vadd.f32 %v986, %v1106
        %v1113 = vadd.f32 %v987, %v1101
        %v1114 = vadd.f32 %v988, %v1107
        %v1115 = vadd.f32 %v989, %v1105
        %s1116 = scalar_lea.vmem %s192, 48
        %v1117 = vld [vmem:[%s1116] sm:$0xff]
        %v1118 = vld [vmem:[%s1116 + $0x8] sm:$0xff]
        %v1119 = vld [vmem:[%s1116 + $0x10] sm:$0xff]
        %v1120 = vld [vmem:[%s1116 + $0x18] sm:$0xff]
        %s1121 = sld [smem:[#allocation2 + $0x9]]
        %v1122 = vstv %s1121
        %v1123 = vmul.f32 %v1117, %v1122
        %v1124 = vmul.f32 %v1118, %v1122
        %v1125 = vmul.f32 %v1119, %v1122
        %v1126 = vmul.f32 %v1120, %v1122
        %v1127 = vadd.f32 %v1028, %v1123
        %v1128 = vadd.f32 %v1029, %v1124
        %v1129 = vadd.f32 %v1030, %v1125
        %v1130 = vadd.f32 %v1031, %v1126
        %s1131 = sld [smem:[#allocation2 + $0x24]]
        %v1132 = vstv %s1131
        %v1133 = vmul.f32 %v1117, %v1132
        %v1134 = vmul.f32 %v1118, %v1132
        %v1135 = vmul.f32 %v1119, %v1132
        %v1136 = vmul.f32 %v1120, %v1132
        %v1137 = vadd.f32 %v1070, %v1133
        %v1138 = vadd.f32 %v1071, %v1134
        %v1139 = vadd.f32 %v1072, %v1135
        %v1140 = vadd.f32 %v1073, %v1136
        %s1141 = sld [smem:[#allocation2 + $0x3f]]
        %v1142 = vstv %s1141
        %v1143 = vmul.f32 %v1117, %v1142
        %v1144 = vmul.f32 %v1118, %v1142
        %v1145 = vmul.f32 %v1119, %v1142
        %v1146 = vmul.f32 %v1120, %v1142
        %v1147 = vadd.f32 %v1112, %v1143
        %v1148 = vadd.f32 %v1113, %v1144
        %v1149 = vadd.f32 %v1114, %v1145
        %v1150 = vadd.f32 %v1115, %v1146
        %s1151 = sld [smem:[#allocation2 + $0xa]]
        %v1152 = vstv %s1151
        %v1153 = vmul.f32 %v1117, %v1152
        %v1154 = vmul.f32 %v1118, %v1152
        %v1155 = vmul.f32 %v1119, %v1152
        %v1156 = vmul.f32 %v1120, %v1152
        %1161 = vrot.lane.b32.xlu0 %v1153, 127
        %v1162 = vpop.permute.xlu0 %1161
        %1163 = vrot.lane.b32.xlu0 %v1154, 127
        %v1164 = vpop.permute.xlu0 %1163
        %1165 = vrot.lane.b32.xlu0 %v1155, 127
        %v1166 = vpop.permute.xlu0 %1165
        %1167 = vrot.lane.b32.xlu0 %v1156, 127
        %v1168 = vpop.permute.xlu0 %1167
        %v1169 = vsel %vm256, %v1162, %v1164
        %v1170 = vsel %vm256, %v1166, %v1168
        %v1175 = vadd.f32 %v1127, %v1169
        %v1176 = vadd.f32 %v1128, %v1164
        %v1177 = vadd.f32 %v1129, %v1170
        %v1178 = vadd.f32 %v1130, %v1168
        %s1179 = sld [smem:[#allocation2 + $0x25]]
        %v1180 = vstv %s1179
        %v1181 = vmul.f32 %v1117, %v1180
        %v1182 = vmul.f32 %v1118, %v1180
        %v1183 = vmul.f32 %v1119, %v1180
        %v1184 = vmul.f32 %v1120, %v1180
        %1189 = vrot.lane.b32.xlu0 %v1181, 127
        %v1190 = vpop.permute.xlu0 %1189
        %1191 = vrot.lane.b32.xlu0 %v1182, 127
        %v1192 = vpop.permute.xlu0 %1191
        %1193 = vrot.lane.b32.xlu0 %v1183, 127
        %v1194 = vpop.permute.xlu0 %1193
        %1195 = vrot.lane.b32.xlu0 %v1184, 127
        %v1196 = vpop.permute.xlu0 %1195
        %v1197 = vsel %vm256, %v1190, %v1192
        %v1198 = vsel %vm256, %v1194, %v1196
        %v1203 = vadd.f32 %v1137, %v1197
        %v1204 = vadd.f32 %v1138, %v1192
        %v1205 = vadd.f32 %v1139, %v1198
        %v1206 = vadd.f32 %v1140, %v1196
        %s1207 = sld [smem:[#allocation2 + $0x40]]
        %v1208 = vstv %s1207
        %v1209 = vmul.f32 %v1117, %v1208
        %v1210 = vmul.f32 %v1118, %v1208
        %v1211 = vmul.f32 %v1119, %v1208
        %v1212 = vmul.f32 %v1120, %v1208
        %1217 = vrot.lane.b32.xlu0 %v1209, 127
        %v1218 = vpop.permute.xlu0 %1217
        %1219 = vrot.lane.b32.xlu0 %v1210, 127
        %v1220 = vpop.permute.xlu0 %1219
        %1221 = vrot.lane.b32.xlu0 %v1211, 127
        %v1222 = vpop.permute.xlu0 %1221
        %1223 = vrot.lane.b32.xlu0 %v1212, 127
        %v1224 = vpop.permute.xlu0 %1223
        %v1225 = vsel %vm256, %v1218, %v1220
        %v1226 = vsel %vm256, %v1222, %v1224
        %v1231 = vadd.f32 %v1147, %v1225
        %v1232 = vadd.f32 %v1148, %v1220
        %v1233 = vadd.f32 %v1149, %v1226
        %v1234 = vadd.f32 %v1150, %v1224
        %s1235 = sld [smem:[#allocation2 + $0xb]]
        %v1236 = vstv %s1235
        %v1237 = vmul.f32 %v1117, %v1236
        %v1238 = vmul.f32 %v1118, %v1236
        %v1239 = vmul.f32 %v1119, %v1236
        %v1240 = vmul.f32 %v1120, %v1236
        %1245 = vrot.lane.b32.xlu0 %v1237, 126
        %v1246 = vpop.permute.xlu0 %1245
        %1247 = vrot.lane.b32.xlu0 %v1238, 126
        %v1248 = vpop.permute.xlu0 %1247
        %1249 = vrot.lane.b32.xlu0 %v1239, 126
        %v1250 = vpop.permute.xlu0 %1249
        %1251 = vrot.lane.b32.xlu0 %v1240, 126
        %v1252 = vpop.permute.xlu0 %1251
        %v1253 = vsel %vm341, %v1246, %v1248
        %v1254 = vsel %vm341, %v1250, %v1252
        %v1259 = vadd.f32 %v1175, %v1253
        %v1260 = vadd.f32 %v1176, %v1248
        %v1261 = vadd.f32 %v1177, %v1254
        %v1262 = vadd.f32 %v1178, %v1252
        %s1263 = sld [smem:[#allocation2 + $0x26]]
        %v1264 = vstv %s1263
        %v1265 = vmul.f32 %v1117, %v1264
        %v1266 = vmul.f32 %v1118, %v1264
        %v1267 = vmul.f32 %v1119, %v1264
        %v1268 = vmul.f32 %v1120, %v1264
        %1273 = vrot.lane.b32.xlu0 %v1265, 126
        %v1274 = vpop.permute.xlu0 %1273
        %1275 = vrot.lane.b32.xlu0 %v1266, 126
        %v1276 = vpop.permute.xlu0 %1275
        %1277 = vrot.lane.b32.xlu0 %v1267, 126
        %v1278 = vpop.permute.xlu0 %1277
        %1279 = vrot.lane.b32.xlu0 %v1268, 126
        %v1280 = vpop.permute.xlu0 %1279
        %v1281 = vsel %vm341, %v1274, %v1276
        %v1282 = vsel %vm341, %v1278, %v1280
        %v1287 = vadd.f32 %v1203, %v1281
        %v1288 = vadd.f32 %v1204, %v1276
        %v1289 = vadd.f32 %v1205, %v1282
        %v1290 = vadd.f32 %v1206, %v1280
        %s1291 = sld [smem:[#allocation2 + $0x41]]
        %v1292 = vstv %s1291
        %v1293 = vmul.f32 %v1117, %v1292
        %v1294 = vmul.f32 %v1118, %v1292
        %v1295 = vmul.f32 %v1119, %v1292
        %v1296 = vmul.f32 %v1120, %v1292
        %1301 = vrot.lane.b32.xlu0 %v1293, 126
        %v1302 = vpop.permute.xlu0 %1301
        %1303 = vrot.lane.b32.xlu0 %v1294, 126
        %v1304 = vpop.permute.xlu0 %1303
        %1305 = vrot.lane.b32.xlu0 %v1295, 126
        %v1306 = vpop.permute.xlu0 %1305
        %1307 = vrot.lane.b32.xlu0 %v1296, 126
        %v1308 = vpop.permute.xlu0 %1307
        %v1309 = vsel %vm341, %v1302, %v1304
        %v1310 = vsel %vm341, %v1306, %v1308
        %v1315 = vadd.f32 %v1231, %v1309
        %v1316 = vadd.f32 %v1232, %v1304
        %v1317 = vadd.f32 %v1233, %v1310
        %v1318 = vadd.f32 %v1234, %v1308
        %v1319 = vld [vmem:[%s1116] sm:$0xfe]
        %v1320 = vld [vmem:[%s1116 + $0x8] sm:$0xfe]
        %v1321 = vld [vmem:[%s1116 + $0x10] sm:$0xff]
        %v1322 = vld [vmem:[%s1116 + $0x18] sm:$0xff]
        %v1323 = vld [vmem:[%s1116 + $0x20] sm:$0x1]
        %v1324 = vld [vmem:[%s1116 + $0x28] sm:$0x1]
        %s1325 = sld [smem:[#allocation2 + $0xc]]
        %v1326 = vstv %s1325
        %v1327 = vmul.f32 %v1319, %v1326
        %v1328 = vmul.f32 %v1320, %v1326
        %v1329 = vmul.f32 %v1321, %v1326
        %v1330 = vmul.f32 %v1322, %v1326
        %v1331 = vmul.f32 %v1323, %v1326
        %v1332 = vmul.f32 %v1324, %v1326
        %v1339 = vrot.slane %v1327, 1
        %v1340 = vrot.slane %v1329, 1
        %v1341 = vsel %vm428, %v1339, %v1340
        %v1342 = vrot.slane %v1328, 1
        %v1343 = vrot.slane %v1330, 1
        %v1344 = vsel %vm428, %v1342, %v1343
        %v1345 = vrot.slane %v1331, 1
        %v1346 = vsel %vm428, %v1340, %v1345
        %v1347 = vrot.slane %v1332, 1
        %v1348 = vsel %vm428, %v1343, %v1347
        %v1353 = vadd.f32 %v1259, %v1341
        %v1354 = vadd.f32 %v1260, %v1344
        %v1355 = vadd.f32 %v1261, %v1346
        %v1356 = vadd.f32 %v1262, %v1348
        %s1357 = sld [smem:[#allocation2 + $0x27]]
        %v1358 = vstv %s1357
        %v1359 = vmul.f32 %v1319, %v1358
        %v1360 = vmul.f32 %v1320, %v1358
        %v1361 = vmul.f32 %v1321, %v1358
        %v1362 = vmul.f32 %v1322, %v1358
        %v1363 = vmul.f32 %v1323, %v1358
        %v1364 = vmul.f32 %v1324, %v1358
        %v1371 = vrot.slane %v1359, 1
        %v1372 = vrot.slane %v1361, 1
        %v1373 = vsel %vm428, %v1371, %v1372
        %v1374 = vrot.slane %v1360, 1
        %v1375 = vrot.slane %v1362, 1
        %v1376 = vsel %vm428, %v1374, %v1375
        %v1377 = vrot.slane %v1363, 1
        %v1378 = vsel %vm428, %v1372, %v1377
        %v1379 = vrot.slane %v1364, 1
        %v1380 = vsel %vm428, %v1375, %v1379
        %v1385 = vadd.f32 %v1287, %v1373
        %v1386 = vadd.f32 %v1288, %v1376
        %v1387 = vadd.f32 %v1289, %v1378
        %v1388 = vadd.f32 %v1290, %v1380
        %s1389 = sld [smem:[#allocation2 + $0x42]]
        %v1390 = vstv %s1389
        %v1391 = vmul.f32 %v1319, %v1390
        %v1392 = vmul.f32 %v1320, %v1390
        %v1393 = vmul.f32 %v1321, %v1390
        %v1394 = vmul.f32 %v1322, %v1390
        %v1395 = vmul.f32 %v1323, %v1390
        %v1396 = vmul.f32 %v1324, %v1390
        %v1403 = vrot.slane %v1391, 1
        %v1404 = vrot.slane %v1393, 1
        %v1405 = vsel %vm428, %v1403, %v1404
        %v1406 = vrot.slane %v1392, 1
        %v1407 = vrot.slane %v1394, 1
        %v1408 = vsel %vm428, %v1406, %v1407
        %v1409 = vrot.slane %v1395, 1
        %v1410 = vsel %vm428, %v1404, %v1409
        %v1411 = vrot.slane %v1396, 1
        %v1412 = vsel %vm428, %v1407, %v1411
        %v1417 = vadd.f32 %v1315, %v1405
        %v1418 = vadd.f32 %v1316, %v1408
        %v1419 = vadd.f32 %v1317, %v1410
        %v1420 = vadd.f32 %v1318, %v1412
        %s1421 = sld [smem:[#allocation2 + $0xd]]
        %v1422 = vstv %s1421
        %v1423 = vmul.f32 %v1319, %v1422
        %v1424 = vmul.f32 %v1320, %v1422
        %v1425 = vmul.f32 %v1321, %v1422
        %v1426 = vmul.f32 %v1322, %v1422
        %v1427 = vmul.f32 %v1323, %v1422
        %v1428 = vmul.f32 %v1324, %v1422
        %v1435 = vrot.slane %v1423, 1
        %v1436 = vrot.slane %v1425, 1
        %v1437 = vsel %vm428, %v1435, %v1436
        %v1438 = vrot.slane %v1424, 1
        %v1439 = vrot.slane %v1426, 1
        %v1440 = vsel %vm428, %v1438, %v1439
        %v1441 = vrot.slane %v1427, 1
        %v1442 = vsel %vm428, %v1436, %v1441
        %v1443 = vrot.slane %v1428, 1
        %v1444 = vsel %vm428, %v1439, %v1443
        %1445 = vrot.lane.b32.xlu0 %v1437, 127
        %v1446 = vpop.permute.xlu0 %1445
        %1447 = vrot.lane.b32.xlu0 %v1440, 127
        %v1448 = vpop.permute.xlu0 %1447
        %1449 = vrot.lane.b32.xlu0 %v1442, 127
        %v1450 = vpop.permute.xlu0 %1449
        %1451 = vrot.lane.b32.xlu0 %v1444, 127
        %v1452 = vpop.permute.xlu0 %1451
        %v1453 = vsel %vm256, %v1446, %v1448
        %v1454 = vsel %vm256, %v1450, %v1452
        %v1459 = vadd.f32 %v1353, %v1453
        %v1460 = vadd.f32 %v1354, %v1448
        %v1461 = vadd.f32 %v1355, %v1454
        %v1462 = vadd.f32 %v1356, %v1452
        %s1463 = sld [smem:[#allocation2 + $0x28]]
        %v1464 = vstv %s1463
        %v1465 = vmul.f32 %v1319, %v1464
        %v1466 = vmul.f32 %v1320, %v1464
        %v1467 = vmul.f32 %v1321, %v1464
        %v1468 = vmul.f32 %v1322, %v1464
        %v1469 = vmul.f32 %v1323, %v1464
        %v1470 = vmul.f32 %v1324, %v1464
        %v1477 = vrot.slane %v1465, 1
        %v1478 = vrot.slane %v1467, 1
        %v1479 = vsel %vm428, %v1477, %v1478
        %v1480 = vrot.slane %v1466, 1
        %v1481 = vrot.slane %v1468, 1
        %v1482 = vsel %vm428, %v1480, %v1481
        %v1483 = vrot.slane %v1469, 1
        %v1484 = vsel %vm428, %v1478, %v1483
        %v1485 = vrot.slane %v1470, 1
        %v1486 = vsel %vm428, %v1481, %v1485
        %1487 = vrot.lane.b32.xlu0 %v1479, 127
        %v1488 = vpop.permute.xlu0 %1487
        %1489 = vrot.lane.b32.xlu0 %v1482, 127
        %v1490 = vpop.permute.xlu0 %1489
        %1491 = vrot.lane.b32.xlu0 %v1484, 127
        %v1492 = vpop.permute.xlu0 %1491
        %1493 = vrot.lane.b32.xlu0 %v1486, 127
        %v1494 = vpop.permute.xlu0 %1493
        %v1495 = vsel %vm256, %v1488, %v1490
        %v1496 = vsel %vm256, %v1492, %v1494
        %v1501 = vadd.f32 %v1385, %v1495
        %v1502 = vadd.f32 %v1386, %v1490
        %v1503 = vadd.f32 %v1387, %v1496
        %v1504 = vadd.f32 %v1388, %v1494
        %s1505 = sld [smem:[#allocation2 + $0x43]]
        %v1506 = vstv %s1505
        %v1507 = vmul.f32 %v1319, %v1506
        %v1508 = vmul.f32 %v1320, %v1506
        %v1509 = vmul.f32 %v1321, %v1506
        %v1510 = vmul.f32 %v1322, %v1506
        %v1511 = vmul.f32 %v1323, %v1506
        %v1512 = vmul.f32 %v1324, %v1506
        %v1519 = vrot.slane %v1507, 1
        %v1520 = vrot.slane %v1509, 1
        %v1521 = vsel %vm428, %v1519, %v1520
        %v1522 = vrot.slane %v1508, 1
        %v1523 = vrot.slane %v1510, 1
        %v1524 = vsel %vm428, %v1522, %v1523
        %v1525 = vrot.slane %v1511, 1
        %v1526 = vsel %vm428, %v1520, %v1525
        %v1527 = vrot.slane %v1512, 1
        %v1528 = vsel %vm428, %v1523, %v1527
        %1529 = vrot.lane.b32.xlu0 %v1521, 127
        %v1530 = vpop.permute.xlu0 %1529
        %1531 = vrot.lane.b32.xlu0 %v1524, 127
        %v1532 = vpop.permute.xlu0 %1531
        %1533 = vrot.lane.b32.xlu0 %v1526, 127
        %v1534 = vpop.permute.xlu0 %1533
        %1535 = vrot.lane.b32.xlu0 %v1528, 127
        %v1536 = vpop.permute.xlu0 %1535
        %v1537 = vsel %vm256, %v1530, %v1532
        %v1538 = vsel %vm256, %v1534, %v1536
        %v1543 = vadd.f32 %v1417, %v1537
        %v1544 = vadd.f32 %v1418, %v1532
        %v1545 = vadd.f32 %v1419, %v1538
        %v1546 = vadd.f32 %v1420, %v1536
        %s1547 = sld [smem:[#allocation2 + $0xe]]
        %v1548 = vstv %s1547
        %v1549 = vmul.f32 %v1319, %v1548
        %v1550 = vmul.f32 %v1320, %v1548
        %v1551 = vmul.f32 %v1321, %v1548
        %v1552 = vmul.f32 %v1322, %v1548
        %v1553 = vmul.f32 %v1323, %v1548
        %v1554 = vmul.f32 %v1324, %v1548
        %v1561 = vrot.slane %v1549, 1
        %v1562 = vrot.slane %v1551, 1
        %v1563 = vsel %vm428, %v1561, %v1562
        %v1564 = vrot.slane %v1550, 1
        %v1565 = vrot.slane %v1552, 1
        %v1566 = vsel %vm428, %v1564, %v1565
        %v1567 = vrot.slane %v1553, 1
        %v1568 = vsel %vm428, %v1562, %v1567
        %v1569 = vrot.slane %v1554, 1
        %v1570 = vsel %vm428, %v1565, %v1569
        %1571 = vrot.lane.b32.xlu0 %v1563, 126
        %v1572 = vpop.permute.xlu0 %1571
        %1573 = vrot.lane.b32.xlu0 %v1566, 126
        %v1574 = vpop.permute.xlu0 %1573
        %1575 = vrot.lane.b32.xlu0 %v1568, 126
        %v1576 = vpop.permute.xlu0 %1575
        %1577 = vrot.lane.b32.xlu0 %v1570, 126
        %v1578 = vpop.permute.xlu0 %1577
        %v1579 = vsel %vm341, %v1572, %v1574
        %v1580 = vsel %vm341, %v1576, %v1578
        %v1585 = vadd.f32 %v1459, %v1579
        %v1586 = vadd.f32 %v1460, %v1574
        %v1587 = vadd.f32 %v1461, %v1580
        %v1588 = vadd.f32 %v1462, %v1578
        %s1589 = sld [smem:[#allocation2 + $0x29]]
        %v1590 = vstv %s1589
        %v1591 = vmul.f32 %v1319, %v1590
        %v1592 = vmul.f32 %v1320, %v1590
        %v1593 = vmul.f32 %v1321, %v1590
        %v1594 = vmul.f32 %v1322, %v1590
        %v1595 = vmul.f32 %v1323, %v1590
        %v1596 = vmul.f32 %v1324, %v1590
        %v1603 = vrot.slane %v1591, 1
        %v1604 = vrot.slane %v1593, 1
        %v1605 = vsel %vm428, %v1603, %v1604
        %v1606 = vrot.slane %v1592, 1
        %v1607 = vrot.slane %v1594, 1
        %v1608 = vsel %vm428, %v1606, %v1607
        %v1609 = vrot.slane %v1595, 1
        %v1610 = vsel %vm428, %v1604, %v1609
        %v1611 = vrot.slane %v1596, 1
        %v1612 = vsel %vm428, %v1607, %v1611
        %1613 = vrot.lane.b32.xlu0 %v1605, 126
        %v1614 = vpop.permute.xlu0 %1613
        %1615 = vrot.lane.b32.xlu0 %v1608, 126
        %v1616 = vpop.permute.xlu0 %1615
        %1617 = vrot.lane.b32.xlu0 %v1610, 126
        %v1618 = vpop.permute.xlu0 %1617
        %1619 = vrot.lane.b32.xlu0 %v1612, 126
        %v1620 = vpop.permute.xlu0 %1619
        %v1621 = vsel %vm341, %v1614, %v1616
        %v1622 = vsel %vm341, %v1618, %v1620
        %v1627 = vadd.f32 %v1501, %v1621
        %v1628 = vadd.f32 %v1502, %v1616
        %v1629 = vadd.f32 %v1503, %v1622
        %v1630 = vadd.f32 %v1504, %v1620
        %s1631 = sld [smem:[#allocation2 + $0x44]]
        %v1632 = vstv %s1631
        %v1633 = vmul.f32 %v1319, %v1632
        %v1634 = vmul.f32 %v1320, %v1632
        %v1635 = vmul.f32 %v1321, %v1632
        %v1636 = vmul.f32 %v1322, %v1632
        %v1637 = vmul.f32 %v1323, %v1632
        %v1638 = vmul.f32 %v1324, %v1632
        %v1645 = vrot.slane %v1633, 1
        %v1646 = vrot.slane %v1635, 1
        %v1647 = vsel %vm428, %v1645, %v1646
        %v1648 = vrot.slane %v1634, 1
        %v1649 = vrot.slane %v1636, 1
        %v1650 = vsel %vm428, %v1648, %v1649
        %v1651 = vrot.slane %v1637, 1
        %v1652 = vsel %vm428, %v1646, %v1651
        %v1653 = vrot.slane %v1638, 1
        %v1654 = vsel %vm428, %v1649, %v1653
        %1655 = vrot.lane.b32.xlu0 %v1647, 126
        %v1656 = vpop.permute.xlu0 %1655
        %1657 = vrot.lane.b32.xlu0 %v1650, 126
        %v1658 = vpop.permute.xlu0 %1657
        %1659 = vrot.lane.b32.xlu0 %v1652, 126
        %v1660 = vpop.permute.xlu0 %1659
        %1661 = vrot.lane.b32.xlu0 %v1654, 126
        %v1662 = vpop.permute.xlu0 %1661
        %v1663 = vsel %vm341, %v1656, %v1658
        %v1664 = vsel %vm341, %v1660, %v1662
        %v1669 = vadd.f32 %v1543, %v1663
        %v1670 = vadd.f32 %v1544, %v1658
        %v1671 = vadd.f32 %v1545, %v1664
        %v1672 = vadd.f32 %v1546, %v1662
        %v1673 = vld [vmem:[%s1116] sm:$0xfc]
        %v1674 = vld [vmem:[%s1116 + $0x8] sm:$0xfc]
        %v1675 = vld [vmem:[%s1116 + $0x20] sm:$0x3]
        %v1676 = vld [vmem:[%s1116 + $0x28] sm:$0x3]
        %s1677 = sld [smem:[#allocation2 + $0xf]]
        %v1678 = vstv %s1677
        %v1679 = vmul.f32 %v1673, %v1678
        %v1680 = vmul.f32 %v1674, %v1678
        %v1681 = vmul.f32 %v1321, %v1678
        %v1682 = vmul.f32 %v1322, %v1678
        %v1683 = vmul.f32 %v1675, %v1678
        %v1684 = vmul.f32 %v1676, %v1678
        %v1691 = vrot.slane %v1679, 2
        %v1692 = vrot.slane %v1681, 2
        %v1693 = vsel %vm781, %v1691, %v1692
        %v1694 = vrot.slane %v1680, 2
        %v1695 = vrot.slane %v1682, 2
        %v1696 = vsel %vm781, %v1694, %v1695
        %v1697 = vrot.slane %v1683, 2
        %v1698 = vsel %vm781, %v1692, %v1697
        %v1699 = vrot.slane %v1684, 2
        %v1700 = vsel %vm781, %v1695, %v1699
        %v1705 = vadd.f32 %v1585, %v1693
        %v1706 = vadd.f32 %v1586, %v1696
        %v1707 = vadd.f32 %v1587, %v1698
        %v1708 = vadd.f32 %v1588, %v1700
        %s1709 = sld [smem:[#allocation2 + $0x2a]]
        %v1710 = vstv %s1709
        %v1711 = vmul.f32 %v1673, %v1710
        %v1712 = vmul.f32 %v1674, %v1710
        %v1713 = vmul.f32 %v1321, %v1710
        %v1714 = vmul.f32 %v1322, %v1710
        %v1715 = vmul.f32 %v1675, %v1710
        %v1716 = vmul.f32 %v1676, %v1710
        %v1723 = vrot.slane %v1711, 2
        %v1724 = vrot.slane %v1713, 2
        %v1725 = vsel %vm781, %v1723, %v1724
        %v1726 = vrot.slane %v1712, 2
        %v1727 = vrot.slane %v1714, 2
        %v1728 = vsel %vm781, %v1726, %v1727
        %v1729 = vrot.slane %v1715, 2
        %v1730 = vsel %vm781, %v1724, %v1729
        %v1731 = vrot.slane %v1716, 2
        %v1732 = vsel %vm781, %v1727, %v1731
        %v1737 = vadd.f32 %v1627, %v1725
        %v1738 = vadd.f32 %v1628, %v1728
        %v1739 = vadd.f32 %v1629, %v1730
        %v1740 = vadd.f32 %v1630, %v1732
        %s1741 = sld [smem:[#allocation2 + $0x45]]
        %v1742 = vstv %s1741
        %v1743 = vmul.f32 %v1673, %v1742
        %v1744 = vmul.f32 %v1674, %v1742
        %v1745 = vmul.f32 %v1321, %v1742
        %v1746 = vmul.f32 %v1322, %v1742
        %v1747 = vmul.f32 %v1675, %v1742
        %v1748 = vmul.f32 %v1676, %v1742
        %v1755 = vrot.slane %v1743, 2
        %v1756 = vrot.slane %v1745, 2
        %v1757 = vsel %vm781, %v1755, %v1756
        %v1758 = vrot.slane %v1744, 2
        %v1759 = vrot.slane %v1746, 2
        %v1760 = vsel %vm781, %v1758, %v1759
        %v1761 = vrot.slane %v1747, 2
        %v1762 = vsel %vm781, %v1756, %v1761
        %v1763 = vrot.slane %v1748, 2
        %v1764 = vsel %vm781, %v1759, %v1763
        %v1769 = vadd.f32 %v1669, %v1757
        %v1770 = vadd.f32 %v1670, %v1760
        %v1771 = vadd.f32 %v1671, %v1762
        %v1772 = vadd.f32 %v1672, %v1764
        %s1773 = sld [smem:[#allocation2 + $0x10]]
        %v1774 = vstv %s1773
        %v1775 = vmul.f32 %v1673, %v1774
        %v1776 = vmul.f32 %v1674, %v1774
        %v1777 = vmul.f32 %v1321, %v1774
        %v1778 = vmul.f32 %v1322, %v1774
        %v1779 = vmul.f32 %v1675, %v1774
        %v1780 = vmul.f32 %v1676, %v1774
        %v1787 = vrot.slane %v1775, 2
        %v1788 = vrot.slane %v1777, 2
        %v1789 = vsel %vm781, %v1787, %v1788
        %v1790 = vrot.slane %v1776, 2
        %v1791 = vrot.slane %v1778, 2
        %v1792 = vsel %vm781, %v1790, %v1791
        %v1793 = vrot.slane %v1779, 2
        %v1794 = vsel %vm781, %v1788, %v1793
        %v1795 = vrot.slane %v1780, 2
        %v1796 = vsel %vm781, %v1791, %v1795
        %1797 = vrot.lane.b32.xlu0 %v1789, 127
        %v1798 = vpop.permute.xlu0 %1797
        %1799 = vrot.lane.b32.xlu0 %v1792, 127
        %v1800 = vpop.permute.xlu0 %1799
        %1801 = vrot.lane.b32.xlu0 %v1794, 127
        %v1802 = vpop.permute.xlu0 %1801
        %1803 = vrot.lane.b32.xlu0 %v1796, 127
        %v1804 = vpop.permute.xlu0 %1803
        %v1805 = vsel %vm256, %v1798, %v1800
        %v1806 = vsel %vm256, %v1802, %v1804
        %v1811 = vadd.f32 %v1705, %v1805
        %v1812 = vadd.f32 %v1706, %v1800
        %v1813 = vadd.f32 %v1707, %v1806
        %v1814 = vadd.f32 %v1708, %v1804
        %s1815 = sld [smem:[#allocation2 + $0x2b]]
        %v1816 = vstv %s1815
        %v1817 = vmul.f32 %v1673, %v1816
        %v1818 = vmul.f32 %v1674, %v1816
        %v1819 = vmul.f32 %v1321, %v1816
        %v1820 = vmul.f32 %v1322, %v1816
        %v1821 = vmul.f32 %v1675, %v1816
        %v1822 = vmul.f32 %v1676, %v1816
        %v1829 = vrot.slane %v1817, 2
        %v1830 = vrot.slane %v1819, 2
        %v1831 = vsel %vm781, %v1829, %v1830
        %v1832 = vrot.slane %v1818, 2
        %v1833 = vrot.slane %v1820, 2
        %v1834 = vsel %vm781, %v1832, %v1833
        %v1835 = vrot.slane %v1821, 2
        %v1836 = vsel %vm781, %v1830, %v1835
        %v1837 = vrot.slane %v1822, 2
        %v1838 = vsel %vm781, %v1833, %v1837
        %1839 = vrot.lane.b32.xlu0 %v1831, 127
        %v1840 = vpop.permute.xlu0 %1839
        %1841 = vrot.lane.b32.xlu0 %v1834, 127
        %v1842 = vpop.permute.xlu0 %1841
        %1843 = vrot.lane.b32.xlu0 %v1836, 127
        %v1844 = vpop.permute.xlu0 %1843
        %1845 = vrot.lane.b32.xlu0 %v1838, 127
        %v1846 = vpop.permute.xlu0 %1845
        %v1847 = vsel %vm256, %v1840, %v1842
        %v1848 = vsel %vm256, %v1844, %v1846
        %v1853 = vadd.f32 %v1737, %v1847
        %v1854 = vadd.f32 %v1738, %v1842
        %v1855 = vadd.f32 %v1739, %v1848
        %v1856 = vadd.f32 %v1740, %v1846
        %s1857 = sld [smem:[#allocation2 + $0x46]]
        %v1858 = vstv %s1857
        %v1859 = vmul.f32 %v1673, %v1858
        %v1860 = vmul.f32 %v1674, %v1858
        %v1861 = vmul.f32 %v1321, %v1858
        %v1862 = vmul.f32 %v1322, %v1858
        %v1863 = vmul.f32 %v1675, %v1858
        %v1864 = vmul.f32 %v1676, %v1858
        %v1871 = vrot.slane %v1859, 2
        %v1872 = vrot.slane %v1861, 2
        %v1873 = vsel %vm781, %v1871, %v1872
        %v1874 = vrot.slane %v1860, 2
        %v1875 = vrot.slane %v1862, 2
        %v1876 = vsel %vm781, %v1874, %v1875
        %v1877 = vrot.slane %v1863, 2
        %v1878 = vsel %vm781, %v1872, %v1877
        %v1879 = vrot.slane %v1864, 2
        %v1880 = vsel %vm781, %v1875, %v1879
        %1881 = vrot.lane.b32.xlu0 %v1873, 127
        %v1882 = vpop.permute.xlu0 %1881
        %1883 = vrot.lane.b32.xlu0 %v1876, 127
        %v1884 = vpop.permute.xlu0 %1883
        %1885 = vrot.lane.b32.xlu0 %v1878, 127
        %v1886 = vpop.permute.xlu0 %1885
        %1887 = vrot.lane.b32.xlu0 %v1880, 127
        %v1888 = vpop.permute.xlu0 %1887
        %v1889 = vsel %vm256, %v1882, %v1884
        %v1890 = vsel %vm256, %v1886, %v1888
        %v1895 = vadd.f32 %v1769, %v1889
        %v1896 = vadd.f32 %v1770, %v1884
        %v1897 = vadd.f32 %v1771, %v1890
        %v1898 = vadd.f32 %v1772, %v1888
        %s1899 = sld [smem:[#allocation2 + $0x11]]
        %v1900 = vstv %s1899
        %v1901 = vmul.f32 %v1673, %v1900
        %v1902 = vmul.f32 %v1674, %v1900
        %v1903 = vmul.f32 %v1321, %v1900
        %v1904 = vmul.f32 %v1322, %v1900
        %v1905 = vmul.f32 %v1675, %v1900
        %v1906 = vmul.f32 %v1676, %v1900
        %v1913 = vrot.slane %v1901, 2
        %v1914 = vrot.slane %v1903, 2
        %v1915 = vsel %vm781, %v1913, %v1914
        %v1916 = vrot.slane %v1902, 2
        %v1917 = vrot.slane %v1904, 2
        %v1918 = vsel %vm781, %v1916, %v1917
        %v1919 = vrot.slane %v1905, 2
        %v1920 = vsel %vm781, %v1914, %v1919
        %v1921 = vrot.slane %v1906, 2
        %v1922 = vsel %vm781, %v1917, %v1921
        %1923 = vrot.lane.b32.xlu0 %v1915, 126
        %v1924 = vpop.permute.xlu0 %1923
        %1925 = vrot.lane.b32.xlu0 %v1918, 126
        %v1926 = vpop.permute.xlu0 %1925
        %1927 = vrot.lane.b32.xlu0 %v1920, 126
        %v1928 = vpop.permute.xlu0 %1927
        %1929 = vrot.lane.b32.xlu0 %v1922, 126
        %v1930 = vpop.permute.xlu0 %1929
        %v1931 = vsel %vm341, %v1924, %v1926
        %v1932 = vsel %vm341, %v1928, %v1930
        %v1937 = vadd.f32 %v1811, %v1931
        %v1938 = vadd.f32 %v1812, %v1926
        %v1939 = vadd.f32 %v1813, %v1932
        %v1940 = vadd.f32 %v1814, %v1930
        %s1941 = sld [smem:[#allocation2 + $0x2c]]
        %v1942 = vstv %s1941
        %v1943 = vmul.f32 %v1673, %v1942
        %v1944 = vmul.f32 %v1674, %v1942
        %v1945 = vmul.f32 %v1321, %v1942
        %v1946 = vmul.f32 %v1322, %v1942
        %v1947 = vmul.f32 %v1675, %v1942
        %v1948 = vmul.f32 %v1676, %v1942
        %v1955 = vrot.slane %v1943, 2
        %v1956 = vrot.slane %v1945, 2
        %v1957 = vsel %vm781, %v1955, %v1956
        %v1958 = vrot.slane %v1944, 2
        %v1959 = vrot.slane %v1946, 2
        %v1960 = vsel %vm781, %v1958, %v1959
        %v1961 = vrot.slane %v1947, 2
        %v1962 = vsel %vm781, %v1956, %v1961
        %v1963 = vrot.slane %v1948, 2
        %v1964 = vsel %vm781, %v1959, %v1963
        %1965 = vrot.lane.b32.xlu0 %v1957, 126
        %v1966 = vpop.permute.xlu0 %1965
        %1967 = vrot.lane.b32.xlu0 %v1960, 126
        %v1968 = vpop.permute.xlu0 %1967
        %1969 = vrot.lane.b32.xlu0 %v1962, 126
        %v1970 = vpop.permute.xlu0 %1969
        %1971 = vrot.lane.b32.xlu0 %v1964, 126
        %v1972 = vpop.permute.xlu0 %1971
        %v1973 = vsel %vm341, %v1966, %v1968
        %v1974 = vsel %vm341, %v1970, %v1972
        %v1979 = vadd.f32 %v1853, %v1973
        %v1980 = vadd.f32 %v1854, %v1968
        %v1981 = vadd.f32 %v1855, %v1974
        %v1982 = vadd.f32 %v1856, %v1972
        %s1983 = sld [smem:[#allocation2 + $0x47]]
        %v1984 = vstv %s1983
        %v1985 = vmul.f32 %v1673, %v1984
        %v1986 = vmul.f32 %v1674, %v1984
        %v1987 = vmul.f32 %v1321, %v1984
        %v1988 = vmul.f32 %v1322, %v1984
        %v1989 = vmul.f32 %v1675, %v1984
        %v1990 = vmul.f32 %v1676, %v1984
        %v1997 = vrot.slane %v1985, 2
        %v1998 = vrot.slane %v1987, 2
        %v1999 = vsel %vm781, %v1997, %v1998
        %v2000 = vrot.slane %v1986, 2
        %v2001 = vrot.slane %v1988, 2
        %v2002 = vsel %vm781, %v2000, %v2001
        %v2003 = vrot.slane %v1989, 2
        %v2004 = vsel %vm781, %v1998, %v2003
        %v2005 = vrot.slane %v1990, 2
        %v2006 = vsel %vm781, %v2001, %v2005
        %2007 = vrot.lane.b32.xlu0 %v1999, 126
        %v2008 = vpop.permute.xlu0 %2007
        %2009 = vrot.lane.b32.xlu0 %v2002, 126
        %v2010 = vpop.permute.xlu0 %2009
        %2011 = vrot.lane.b32.xlu0 %v2004, 126
        %v2012 = vpop.permute.xlu0 %2011
        %2013 = vrot.lane.b32.xlu0 %v2006, 126
        %v2014 = vpop.permute.xlu0 %2013
        %v2015 = vsel %vm341, %v2008, %v2010
        %v2016 = vsel %vm341, %v2012, %v2014
        %v2021 = vadd.f32 %v1895, %v2015
        %v2022 = vadd.f32 %v1896, %v2010
        %v2023 = vadd.f32 %v1897, %v2016
        %v2024 = vadd.f32 %v1898, %v2014
        %s2025 = scalar_lea.vmem %s192, 96
        %v2026 = vld [vmem:[%s2025] sm:$0xff]
        %v2027 = vld [vmem:[%s2025 + $0x8] sm:$0xff]
        %v2028 = vld [vmem:[%s2025 + $0x10] sm:$0xff]
        %v2029 = vld [vmem:[%s2025 + $0x18] sm:$0xff]
        %s2030 = sld [smem:[#allocation2 + $0x12]]
        %v2031 = vstv %s2030
        %v2032 = vmul.f32 %v2026, %v2031
        %v2033 = vmul.f32 %v2027, %v2031
        %v2034 = vmul.f32 %v2028, %v2031
        %v2035 = vmul.f32 %v2029, %v2031
        %v2036 = vadd.f32 %v1937, %v2032
        %v2037 = vadd.f32 %v1938, %v2033
        %v2038 = vadd.f32 %v1939, %v2034
        %v2039 = vadd.f32 %v1940, %v2035
        %s2040 = sld [smem:[#allocation2 + $0x2d]]
        %v2041 = vstv %s2040
        %v2042 = vmul.f32 %v2026, %v2041
        %v2043 = vmul.f32 %v2027, %v2041
        %v2044 = vmul.f32 %v2028, %v2041
        %v2045 = vmul.f32 %v2029, %v2041
        %v2046 = vadd.f32 %v1979, %v2042
        %v2047 = vadd.f32 %v1980, %v2043
        %v2048 = vadd.f32 %v1981, %v2044
        %v2049 = vadd.f32 %v1982, %v2045
        %s2050 = sld [smem:[#allocation2 + $0x48]]
        %v2051 = vstv %s2050
        %v2052 = vmul.f32 %v2026, %v2051
        %v2053 = vmul.f32 %v2027, %v2051
        %v2054 = vmul.f32 %v2028, %v2051
        %v2055 = vmul.f32 %v2029, %v2051
        %v2056 = vadd.f32 %v2021, %v2052
        %v2057 = vadd.f32 %v2022, %v2053
        %v2058 = vadd.f32 %v2023, %v2054
        %v2059 = vadd.f32 %v2024, %v2055
        %s2060 = sld [smem:[#allocation2 + $0x13]]
        %v2061 = vstv %s2060
        %v2062 = vmul.f32 %v2026, %v2061
        %v2063 = vmul.f32 %v2027, %v2061
        %v2064 = vmul.f32 %v2028, %v2061
        %v2065 = vmul.f32 %v2029, %v2061
        %2070 = vrot.lane.b32.xlu0 %v2062, 127
        %v2071 = vpop.permute.xlu0 %2070
        %2072 = vrot.lane.b32.xlu0 %v2063, 127
        %v2073 = vpop.permute.xlu0 %2072
        %2074 = vrot.lane.b32.xlu0 %v2064, 127
        %v2075 = vpop.permute.xlu0 %2074
        %2076 = vrot.lane.b32.xlu0 %v2065, 127
        %v2077 = vpop.permute.xlu0 %2076
        %v2078 = vsel %vm256, %v2071, %v2073
        %v2079 = vsel %vm256, %v2075, %v2077
        %v2084 = vadd.f32 %v2036, %v2078
        %v2085 = vadd.f32 %v2037, %v2073
        %v2086 = vadd.f32 %v2038, %v2079
        %v2087 = vadd.f32 %v2039, %v2077
        %s2088 = sld [smem:[#allocation2 + $0x2e]]
        %v2089 = vstv %s2088
        %v2090 = vmul.f32 %v2026, %v2089
        %v2091 = vmul.f32 %v2027, %v2089
        %v2092 = vmul.f32 %v2028, %v2089
        %v2093 = vmul.f32 %v2029, %v2089
        %2098 = vrot.lane.b32.xlu0 %v2090, 127
        %v2099 = vpop.permute.xlu0 %2098
        %2100 = vrot.lane.b32.xlu0 %v2091, 127
        %v2101 = vpop.permute.xlu0 %2100
        %2102 = vrot.lane.b32.xlu0 %v2092, 127
        %v2103 = vpop.permute.xlu0 %2102
        %2104 = vrot.lane.b32.xlu0 %v2093, 127
        %v2105 = vpop.permute.xlu0 %2104
        %v2106 = vsel %vm256, %v2099, %v2101
        %v2107 = vsel %vm256, %v2103, %v2105
        %v2112 = vadd.f32 %v2046, %v2106
        %v2113 = vadd.f32 %v2047, %v2101
        %v2114 = vadd.f32 %v2048, %v2107
        %v2115 = vadd.f32 %v2049, %v2105
        %s2116 = sld [smem:[#allocation2 + $0x49]]
        %v2117 = vstv %s2116
        %v2118 = vmul.f32 %v2026, %v2117
        %v2119 = vmul.f32 %v2027, %v2117
        %v2120 = vmul.f32 %v2028, %v2117
        %v2121 = vmul.f32 %v2029, %v2117
        %2126 = vrot.lane.b32.xlu0 %v2118, 127
        %v2127 = vpop.permute.xlu0 %2126
        %2128 = vrot.lane.b32.xlu0 %v2119, 127
        %v2129 = vpop.permute.xlu0 %2128
        %2130 = vrot.lane.b32.xlu0 %v2120, 127
        %v2131 = vpop.permute.xlu0 %2130
        %2132 = vrot.lane.b32.xlu0 %v2121, 127
        %v2133 = vpop.permute.xlu0 %2132
        %v2134 = vsel %vm256, %v2127, %v2129
        %v2135 = vsel %vm256, %v2131, %v2133
        %v2140 = vadd.f32 %v2056, %v2134
        %v2141 = vadd.f32 %v2057, %v2129
        %v2142 = vadd.f32 %v2058, %v2135
        %v2143 = vadd.f32 %v2059, %v2133
        %s2144 = sld [smem:[#allocation2 + $0x14]]
        %v2145 = vstv %s2144
        %v2146 = vmul.f32 %v2026, %v2145
        %v2147 = vmul.f32 %v2027, %v2145
        %v2148 = vmul.f32 %v2028, %v2145
        %v2149 = vmul.f32 %v2029, %v2145
        %2154 = vrot.lane.b32.xlu0 %v2146, 126
        %v2155 = vpop.permute.xlu0 %2154
        %2156 = vrot.lane.b32.xlu0 %v2147, 126
        %v2157 = vpop.permute.xlu0 %2156
        %2158 = vrot.lane.b32.xlu0 %v2148, 126
        %v2159 = vpop.permute.xlu0 %2158
        %2160 = vrot.lane.b32.xlu0 %v2149, 126
        %v2161 = vpop.permute.xlu0 %2160
        %v2162 = vsel %vm341, %v2155, %v2157
        %v2163 = vsel %vm341, %v2159, %v2161
        %v2168 = vadd.f32 %v2084, %v2162
        %v2169 = vadd.f32 %v2085, %v2157
        %v2170 = vadd.f32 %v2086, %v2163
        %v2171 = vadd.f32 %v2087, %v2161
        %s2172 = sld [smem:[#allocation2 + $0x2f]]
        %v2173 = vstv %s2172
        %v2174 = vmul.f32 %v2026, %v2173
        %v2175 = vmul.f32 %v2027, %v2173
        %v2176 = vmul.f32 %v2028, %v2173
        %v2177 = vmul.f32 %v2029, %v2173
        %2182 = vrot.lane.b32.xlu0 %v2174, 126
        %v2183 = vpop.permute.xlu0 %2182
        %2184 = vrot.lane.b32.xlu0 %v2175, 126
        %v2185 = vpop.permute.xlu0 %2184
        %2186 = vrot.lane.b32.xlu0 %v2176, 126
        %v2187 = vpop.permute.xlu0 %2186
        %2188 = vrot.lane.b32.xlu0 %v2177, 126
        %v2189 = vpop.permute.xlu0 %2188
        %v2190 = vsel %vm341, %v2183, %v2185
        %v2191 = vsel %vm341, %v2187, %v2189
        %v2196 = vadd.f32 %v2112, %v2190
        %v2197 = vadd.f32 %v2113, %v2185
        %v2198 = vadd.f32 %v2114, %v2191
        %v2199 = vadd.f32 %v2115, %v2189
        %s2200 = sld [smem:[#allocation2 + $0x4a]]
        %v2201 = vstv %s2200
        %v2202 = vmul.f32 %v2026, %v2201
        %v2203 = vmul.f32 %v2027, %v2201
        %v2204 = vmul.f32 %v2028, %v2201
        %v2205 = vmul.f32 %v2029, %v2201
        %2210 = vrot.lane.b32.xlu0 %v2202, 126
        %v2211 = vpop.permute.xlu0 %2210
        %2212 = vrot.lane.b32.xlu0 %v2203, 126
        %v2213 = vpop.permute.xlu0 %2212
        %2214 = vrot.lane.b32.xlu0 %v2204, 126
        %v2215 = vpop.permute.xlu0 %2214
        %2216 = vrot.lane.b32.xlu0 %v2205, 126
        %v2217 = vpop.permute.xlu0 %2216
        %v2218 = vsel %vm341, %v2211, %v2213
        %v2219 = vsel %vm341, %v2215, %v2217
        %v2224 = vadd.f32 %v2140, %v2218
        %v2225 = vadd.f32 %v2141, %v2213
        %v2226 = vadd.f32 %v2142, %v2219
        %v2227 = vadd.f32 %v2143, %v2217
        %v2228 = vld [vmem:[%s2025] sm:$0xfe]
        %v2229 = vld [vmem:[%s2025 + $0x8] sm:$0xfe]
        %v2230 = vld [vmem:[%s2025 + $0x10] sm:$0xff]
        %v2231 = vld [vmem:[%s2025 + $0x18] sm:$0xff]
        %v2232 = vld [vmem:[%s2025 + $0x20] sm:$0x1]
        %v2233 = vld [vmem:[%s2025 + $0x28] sm:$0x1]
        %s2234 = sld [smem:[#allocation2 + $0x15]]
        %v2235 = vstv %s2234
        %v2236 = vmul.f32 %v2228, %v2235
        %v2237 = vmul.f32 %v2229, %v2235
        %v2238 = vmul.f32 %v2230, %v2235
        %v2239 = vmul.f32 %v2231, %v2235
        %v2240 = vmul.f32 %v2232, %v2235
        %v2241 = vmul.f32 %v2233, %v2235
        %v2248 = vrot.slane %v2236, 1
        %v2249 = vrot.slane %v2238, 1
        %v2250 = vsel %vm428, %v2248, %v2249
        %v2251 = vrot.slane %v2237, 1
        %v2252 = vrot.slane %v2239, 1
        %v2253 = vsel %vm428, %v2251, %v2252
        %v2254 = vrot.slane %v2240, 1
        %v2255 = vsel %vm428, %v2249, %v2254
        %v2256 = vrot.slane %v2241, 1
        %v2257 = vsel %vm428, %v2252, %v2256
        %v2262 = vadd.f32 %v2168, %v2250
        %v2263 = vadd.f32 %v2169, %v2253
        %v2264 = vadd.f32 %v2170, %v2255
        %v2265 = vadd.f32 %v2171, %v2257
        %s2266 = sld [smem:[#allocation2 + $0x30]]
        %v2267 = vstv %s2266
        %v2268 = vmul.f32 %v2228, %v2267
        %v2269 = vmul.f32 %v2229, %v2267
        %v2270 = vmul.f32 %v2230, %v2267
        %v2271 = vmul.f32 %v2231, %v2267
        %v2272 = vmul.f32 %v2232, %v2267
        %v2273 = vmul.f32 %v2233, %v2267
        %v2280 = vrot.slane %v2268, 1
        %v2281 = vrot.slane %v2270, 1
        %v2282 = vsel %vm428, %v2280, %v2281
        %v2283 = vrot.slane %v2269, 1
        %v2284 = vrot.slane %v2271, 1
        %v2285 = vsel %vm428, %v2283, %v2284
        %v2286 = vrot.slane %v2272, 1
        %v2287 = vsel %vm428, %v2281, %v2286
        %v2288 = vrot.slane %v2273, 1
        %v2289 = vsel %vm428, %v2284, %v2288
        %v2294 = vadd.f32 %v2196, %v2282
        %v2295 = vadd.f32 %v2197, %v2285
        %v2296 = vadd.f32 %v2198, %v2287
        %v2297 = vadd.f32 %v2199, %v2289
        %s2298 = sld [smem:[#allocation2 + $0x4b]]
        %v2299 = vstv %s2298
        %v2300 = vmul.f32 %v2228, %v2299
        %v2301 = vmul.f32 %v2229, %v2299
        %v2302 = vmul.f32 %v2230, %v2299
        %v2303 = vmul.f32 %v2231, %v2299
        %v2304 = vmul.f32 %v2232, %v2299
        %v2305 = vmul.f32 %v2233, %v2299
        %v2312 = vrot.slane %v2300, 1
        %v2313 = vrot.slane %v2302, 1
        %v2314 = vsel %vm428, %v2312, %v2313
        %v2315 = vrot.slane %v2301, 1
        %v2316 = vrot.slane %v2303, 1
        %v2317 = vsel %vm428, %v2315, %v2316
        %v2318 = vrot.slane %v2304, 1
        %v2319 = vsel %vm428, %v2313, %v2318
        %v2320 = vrot.slane %v2305, 1
        %v2321 = vsel %vm428, %v2316, %v2320
        %v2326 = vadd.f32 %v2224, %v2314
        %v2327 = vadd.f32 %v2225, %v2317
        %v2328 = vadd.f32 %v2226, %v2319
        %v2329 = vadd.f32 %v2227, %v2321
        %s2330 = sld [smem:[#allocation2 + $0x16]]
        %v2331 = vstv %s2330
        %v2332 = vmul.f32 %v2228, %v2331
        %v2333 = vmul.f32 %v2229, %v2331
        %v2334 = vmul.f32 %v2230, %v2331
        %v2335 = vmul.f32 %v2231, %v2331
        %v2336 = vmul.f32 %v2232, %v2331
        %v2337 = vmul.f32 %v2233, %v2331
        %v2344 = vrot.slane %v2332, 1
        %v2345 = vrot.slane %v2334, 1
        %v2346 = vsel %vm428, %v2344, %v2345
        %v2347 = vrot.slane %v2333, 1
        %v2348 = vrot.slane %v2335, 1
        %v2349 = vsel %vm428, %v2347, %v2348
        %v2350 = vrot.slane %v2336, 1
        %v2351 = vsel %vm428, %v2345, %v2350
        %v2352 = vrot.slane %v2337, 1
        %v2353 = vsel %vm428, %v2348, %v2352
        %2354 = vrot.lane.b32.xlu0 %v2346, 127
        %v2355 = vpop.permute.xlu0 %2354
        %2356 = vrot.lane.b32.xlu0 %v2349, 127
        %v2357 = vpop.permute.xlu0 %2356
        %2358 = vrot.lane.b32.xlu0 %v2351, 127
        %v2359 = vpop.permute.xlu0 %2358
        %2360 = vrot.lane.b32.xlu0 %v2353, 127
        %v2361 = vpop.permute.xlu0 %2360
        %v2362 = vsel %vm256, %v2355, %v2357
        %v2363 = vsel %vm256, %v2359, %v2361
        %v2368 = vadd.f32 %v2262, %v2362
        %v2369 = vadd.f32 %v2263, %v2357
        %v2370 = vadd.f32 %v2264, %v2363
        %v2371 = vadd.f32 %v2265, %v2361
        %s2372 = sld [smem:[#allocation2 + $0x31]]
        %v2373 = vstv %s2372
        %v2374 = vmul.f32 %v2228, %v2373
        %v2375 = vmul.f32 %v2229, %v2373
        %v2376 = vmul.f32 %v2230, %v2373
        %v2377 = vmul.f32 %v2231, %v2373
        %v2378 = vmul.f32 %v2232, %v2373
        %v2379 = vmul.f32 %v2233, %v2373
        %v2386 = vrot.slane %v2374, 1
        %v2387 = vrot.slane %v2376, 1
        %v2388 = vsel %vm428, %v2386, %v2387
        %v2389 = vrot.slane %v2375, 1
        %v2390 = vrot.slane %v2377, 1
        %v2391 = vsel %vm428, %v2389, %v2390
        %v2392 = vrot.slane %v2378, 1
        %v2393 = vsel %vm428, %v2387, %v2392
        %v2394 = vrot.slane %v2379, 1
        %v2395 = vsel %vm428, %v2390, %v2394
        %2396 = vrot.lane.b32.xlu0 %v2388, 127
        %v2397 = vpop.permute.xlu0 %2396
        %2398 = vrot.lane.b32.xlu0 %v2391, 127
        %v2399 = vpop.permute.xlu0 %2398
        %2400 = vrot.lane.b32.xlu0 %v2393, 127
        %v2401 = vpop.permute.xlu0 %2400
        %2402 = vrot.lane.b32.xlu0 %v2395, 127
        %v2403 = vpop.permute.xlu0 %2402
        %v2404 = vsel %vm256, %v2397, %v2399
        %v2405 = vsel %vm256, %v2401, %v2403
        %v2410 = vadd.f32 %v2294, %v2404
        %v2411 = vadd.f32 %v2295, %v2399
        %v2412 = vadd.f32 %v2296, %v2405
        %v2413 = vadd.f32 %v2297, %v2403
        %s2414 = sld [smem:[#allocation2 + $0x4c]]
        %v2415 = vstv %s2414
        %v2416 = vmul.f32 %v2228, %v2415
        %v2417 = vmul.f32 %v2229, %v2415
        %v2418 = vmul.f32 %v2230, %v2415
        %v2419 = vmul.f32 %v2231, %v2415
        %v2420 = vmul.f32 %v2232, %v2415
        %v2421 = vmul.f32 %v2233, %v2415
        %v2428 = vrot.slane %v2416, 1
        %v2429 = vrot.slane %v2418, 1
        %v2430 = vsel %vm428, %v2428, %v2429
        %v2431 = vrot.slane %v2417, 1
        %v2432 = vrot.slane %v2419, 1
        %v2433 = vsel %vm428, %v2431, %v2432
        %v2434 = vrot.slane %v2420, 1
        %v2435 = vsel %vm428, %v2429, %v2434
        %v2436 = vrot.slane %v2421, 1
        %v2437 = vsel %vm428, %v2432, %v2436
        %2438 = vrot.lane.b32.xlu0 %v2430, 127
        %v2439 = vpop.permute.xlu0 %2438
        %2440 = vrot.lane.b32.xlu0 %v2433, 127
        %v2441 = vpop.permute.xlu0 %2440
        %2442 = vrot.lane.b32.xlu0 %v2435, 127
        %v2443 = vpop.permute.xlu0 %2442
        %2444 = vrot.lane.b32.xlu0 %v2437, 127
        %v2445 = vpop.permute.xlu0 %2444
        %v2446 = vsel %vm256, %v2439, %v2441
        %v2447 = vsel %vm256, %v2443, %v2445
        %v2452 = vadd.f32 %v2326, %v2446
        %v2453 = vadd.f32 %v2327, %v2441
        %v2454 = vadd.f32 %v2328, %v2447
        %v2455 = vadd.f32 %v2329, %v2445
        %s2456 = sld [smem:[#allocation2 + $0x17]]
        %v2457 = vstv %s2456
        %v2458 = vmul.f32 %v2228, %v2457
        %v2459 = vmul.f32 %v2229, %v2457
        %v2460 = vmul.f32 %v2230, %v2457
        %v2461 = vmul.f32 %v2231, %v2457
        %v2462 = vmul.f32 %v2232, %v2457
        %v2463 = vmul.f32 %v2233, %v2457
        %v2470 = vrot.slane %v2458, 1
        %v2471 = vrot.slane %v2460, 1
        %v2472 = vsel %vm428, %v2470, %v2471
        %v2473 = vrot.slane %v2459, 1
        %v2474 = vrot.slane %v2461, 1
        %v2475 = vsel %vm428, %v2473, %v2474
        %v2476 = vrot.slane %v2462, 1
        %v2477 = vsel %vm428, %v2471, %v2476
        %v2478 = vrot.slane %v2463, 1
        %v2479 = vsel %vm428, %v2474, %v2478
        %2480 = vrot.lane.b32.xlu0 %v2472, 126
        %v2481 = vpop.permute.xlu0 %2480
        %2482 = vrot.lane.b32.xlu0 %v2475, 126
        %v2483 = vpop.permute.xlu0 %2482
        %2484 = vrot.lane.b32.xlu0 %v2477, 126
        %v2485 = vpop.permute.xlu0 %2484
        %2486 = vrot.lane.b32.xlu0 %v2479, 126
        %v2487 = vpop.permute.xlu0 %2486
        %v2488 = vsel %vm341, %v2481, %v2483
        %v2489 = vsel %vm341, %v2485, %v2487
        %v2494 = vadd.f32 %v2368, %v2488
        %v2495 = vadd.f32 %v2369, %v2483
        %v2496 = vadd.f32 %v2370, %v2489
        %v2497 = vadd.f32 %v2371, %v2487
        %s2498 = sld [smem:[#allocation2 + $0x32]]
        %v2499 = vstv %s2498
        %v2500 = vmul.f32 %v2228, %v2499
        %v2501 = vmul.f32 %v2229, %v2499
        %v2502 = vmul.f32 %v2230, %v2499
        %v2503 = vmul.f32 %v2231, %v2499
        %v2504 = vmul.f32 %v2232, %v2499
        %v2505 = vmul.f32 %v2233, %v2499
        %v2512 = vrot.slane %v2500, 1
        %v2513 = vrot.slane %v2502, 1
        %v2514 = vsel %vm428, %v2512, %v2513
        %v2515 = vrot.slane %v2501, 1
        %v2516 = vrot.slane %v2503, 1
        %v2517 = vsel %vm428, %v2515, %v2516
        %v2518 = vrot.slane %v2504, 1
        %v2519 = vsel %vm428, %v2513, %v2518
        %v2520 = vrot.slane %v2505, 1
        %v2521 = vsel %vm428, %v2516, %v2520
        %2522 = vrot.lane.b32.xlu0 %v2514, 126
        %v2523 = vpop.permute.xlu0 %2522
        %2524 = vrot.lane.b32.xlu0 %v2517, 126
        %v2525 = vpop.permute.xlu0 %2524
        %2526 = vrot.lane.b32.xlu0 %v2519, 126
        %v2527 = vpop.permute.xlu0 %2526
        %2528 = vrot.lane.b32.xlu0 %v2521, 126
        %v2529 = vpop.permute.xlu0 %2528
        %v2530 = vsel %vm341, %v2523, %v2525
        %v2531 = vsel %vm341, %v2527, %v2529
        %v2536 = vadd.f32 %v2410, %v2530
        %v2537 = vadd.f32 %v2411, %v2525
        %v2538 = vadd.f32 %v2412, %v2531
        %v2539 = vadd.f32 %v2413, %v2529
        %s2540 = sld [smem:[#allocation2 + $0x4d]]
        %v2541 = vstv %s2540
        %v2542 = vmul.f32 %v2228, %v2541
        %v2543 = vmul.f32 %v2229, %v2541
        %v2544 = vmul.f32 %v2230, %v2541
        %v2545 = vmul.f32 %v2231, %v2541
        %v2546 = vmul.f32 %v2232, %v2541
        %v2547 = vmul.f32 %v2233, %v2541
        %v2554 = vrot.slane %v2542, 1
        %v2555 = vrot.slane %v2544, 1
        %v2556 = vsel %vm428, %v2554, %v2555
        %v2557 = vrot.slane %v2543, 1
        %v2558 = vrot.slane %v2545, 1
        %v2559 = vsel %vm428, %v2557, %v2558
        %v2560 = vrot.slane %v2546, 1
        %v2561 = vsel %vm428, %v2555, %v2560
        %v2562 = vrot.slane %v2547, 1
        %v2563 = vsel %vm428, %v2558, %v2562
        %2564 = vrot.lane.b32.xlu0 %v2556, 126
        %v2565 = vpop.permute.xlu0 %2564
        %2566 = vrot.lane.b32.xlu0 %v2559, 126
        %v2567 = vpop.permute.xlu0 %2566
        %2568 = vrot.lane.b32.xlu0 %v2561, 126
        %v2569 = vpop.permute.xlu0 %2568
        %2570 = vrot.lane.b32.xlu0 %v2563, 126
        %v2571 = vpop.permute.xlu0 %2570
        %v2572 = vsel %vm341, %v2565, %v2567
        %v2573 = vsel %vm341, %v2569, %v2571
        %v2578 = vadd.f32 %v2452, %v2572
        %v2579 = vadd.f32 %v2453, %v2567
        %v2580 = vadd.f32 %v2454, %v2573
        %v2581 = vadd.f32 %v2455, %v2571
        %v2582 = vld [vmem:[%s2025] sm:$0xfc]
        %v2583 = vld [vmem:[%s2025 + $0x8] sm:$0xfc]
        %v2584 = vld [vmem:[%s2025 + $0x20] sm:$0x3]
        %v2585 = vld [vmem:[%s2025 + $0x28] sm:$0x3]
        %s2586 = sld [smem:[#allocation2 + $0x18]]
        %v2587 = vstv %s2586
        %v2588 = vmul.f32 %v2582, %v2587
        %v2589 = vmul.f32 %v2583, %v2587
        %v2590 = vmul.f32 %v2230, %v2587
        %v2591 = vmul.f32 %v2231, %v2587
        %v2592 = vmul.f32 %v2584, %v2587
        %v2593 = vmul.f32 %v2585, %v2587
        %v2600 = vrot.slane %v2588, 2
        %v2601 = vrot.slane %v2590, 2
        %v2602 = vsel %vm781, %v2600, %v2601
        %v2603 = vrot.slane %v2589, 2
        %v2604 = vrot.slane %v2591, 2
        %v2605 = vsel %vm781, %v2603, %v2604
        %v2606 = vrot.slane %v2592, 2
        %v2607 = vsel %vm781, %v2601, %v2606
        %v2608 = vrot.slane %v2593, 2
        %v2609 = vsel %vm781, %v2604, %v2608
        %v2614 = vadd.f32 %v2494, %v2602
        %v2615 = vadd.f32 %v2495, %v2605
        %v2616 = vadd.f32 %v2496, %v2607
        %v2617 = vadd.f32 %v2497, %v2609
        %s2618 = sld [smem:[#allocation2 + $0x33]]
        %v2619 = vstv %s2618
        %v2620 = vmul.f32 %v2582, %v2619
        %v2621 = vmul.f32 %v2583, %v2619
        %v2622 = vmul.f32 %v2230, %v2619
        %v2623 = vmul.f32 %v2231, %v2619
        %v2624 = vmul.f32 %v2584, %v2619
        %v2625 = vmul.f32 %v2585, %v2619
        %v2632 = vrot.slane %v2620, 2
        %v2633 = vrot.slane %v2622, 2
        %v2634 = vsel %vm781, %v2632, %v2633
        %v2635 = vrot.slane %v2621, 2
        %v2636 = vrot.slane %v2623, 2
        %v2637 = vsel %vm781, %v2635, %v2636
        %v2638 = vrot.slane %v2624, 2
        %v2639 = vsel %vm781, %v2633, %v2638
        %v2640 = vrot.slane %v2625, 2
        %v2641 = vsel %vm781, %v2636, %v2640
        %v2646 = vadd.f32 %v2536, %v2634
        %v2647 = vadd.f32 %v2537, %v2637
        %v2648 = vadd.f32 %v2538, %v2639
        %v2649 = vadd.f32 %v2539, %v2641
        %s2650 = sld [smem:[#allocation2 + $0x4e]]
        %v2651 = vstv %s2650
        %v2652 = vmul.f32 %v2582, %v2651
        %v2653 = vmul.f32 %v2583, %v2651
        %v2654 = vmul.f32 %v2230, %v2651
        %v2655 = vmul.f32 %v2231, %v2651
        %v2656 = vmul.f32 %v2584, %v2651
        %v2657 = vmul.f32 %v2585, %v2651
        %v2664 = vrot.slane %v2652, 2
        %v2665 = vrot.slane %v2654, 2
        %v2666 = vsel %vm781, %v2664, %v2665
        %v2667 = vrot.slane %v2653, 2
        %v2668 = vrot.slane %v2655, 2
        %v2669 = vsel %vm781, %v2667, %v2668
        %v2670 = vrot.slane %v2656, 2
        %v2671 = vsel %vm781, %v2665, %v2670
        %v2672 = vrot.slane %v2657, 2
        %v2673 = vsel %vm781, %v2668, %v2672
        %v2678 = vadd.f32 %v2578, %v2666
        %v2679 = vadd.f32 %v2579, %v2669
        %v2680 = vadd.f32 %v2580, %v2671
        %v2681 = vadd.f32 %v2581, %v2673
        %s2682 = sld [smem:[#allocation2 + $0x19]]
        %v2683 = vstv %s2682
        %v2684 = vmul.f32 %v2582, %v2683
        %v2685 = vmul.f32 %v2583, %v2683
        %v2686 = vmul.f32 %v2230, %v2683
        %v2687 = vmul.f32 %v2231, %v2683
        %v2688 = vmul.f32 %v2584, %v2683
        %v2689 = vmul.f32 %v2585, %v2683
        %v2696 = vrot.slane %v2684, 2
        %v2697 = vrot.slane %v2686, 2
        %v2698 = vsel %vm781, %v2696, %v2697
        %v2699 = vrot.slane %v2685, 2
        %v2700 = vrot.slane %v2687, 2
        %v2701 = vsel %vm781, %v2699, %v2700
        %v2702 = vrot.slane %v2688, 2
        %v2703 = vsel %vm781, %v2697, %v2702
        %v2704 = vrot.slane %v2689, 2
        %v2705 = vsel %vm781, %v2700, %v2704
        %2706 = vrot.lane.b32.xlu0 %v2698, 127
        %v2707 = vpop.permute.xlu0 %2706
        %2708 = vrot.lane.b32.xlu0 %v2701, 127
        %v2709 = vpop.permute.xlu0 %2708
        %2710 = vrot.lane.b32.xlu0 %v2703, 127
        %v2711 = vpop.permute.xlu0 %2710
        %2712 = vrot.lane.b32.xlu0 %v2705, 127
        %v2713 = vpop.permute.xlu0 %2712
        %v2714 = vsel %vm256, %v2707, %v2709
        %v2715 = vsel %vm256, %v2711, %v2713
        %v2720 = vadd.f32 %v2614, %v2714
        %v2721 = vadd.f32 %v2615, %v2709
        %v2722 = vadd.f32 %v2616, %v2715
        %v2723 = vadd.f32 %v2617, %v2713
        %s2724 = sld [smem:[#allocation2 + $0x34]]
        %v2725 = vstv %s2724
        %v2726 = vmul.f32 %v2582, %v2725
        %v2727 = vmul.f32 %v2583, %v2725
        %v2728 = vmul.f32 %v2230, %v2725
        %v2729 = vmul.f32 %v2231, %v2725
        %v2730 = vmul.f32 %v2584, %v2725
        %v2731 = vmul.f32 %v2585, %v2725
        %v2738 = vrot.slane %v2726, 2
        %v2739 = vrot.slane %v2728, 2
        %v2740 = vsel %vm781, %v2738, %v2739
        %v2741 = vrot.slane %v2727, 2
        %v2742 = vrot.slane %v2729, 2
        %v2743 = vsel %vm781, %v2741, %v2742
        %v2744 = vrot.slane %v2730, 2
        %v2745 = vsel %vm781, %v2739, %v2744
        %v2746 = vrot.slane %v2731, 2
        %v2747 = vsel %vm781, %v2742, %v2746
        %2748 = vrot.lane.b32.xlu0 %v2740, 127
        %v2749 = vpop.permute.xlu0 %2748
        %2750 = vrot.lane.b32.xlu0 %v2743, 127
        %v2751 = vpop.permute.xlu0 %2750
        %2752 = vrot.lane.b32.xlu0 %v2745, 127
        %v2753 = vpop.permute.xlu0 %2752
        %2754 = vrot.lane.b32.xlu0 %v2747, 127
        %v2755 = vpop.permute.xlu0 %2754
        %v2756 = vsel %vm256, %v2749, %v2751
        %v2757 = vsel %vm256, %v2753, %v2755
        %v2762 = vadd.f32 %v2646, %v2756
        %v2763 = vadd.f32 %v2647, %v2751
        %v2764 = vadd.f32 %v2648, %v2757
        %v2765 = vadd.f32 %v2649, %v2755
        %s2766 = sld [smem:[#allocation2 + $0x4f]]
        %v2767 = vstv %s2766
        %v2768 = vmul.f32 %v2582, %v2767
        %v2769 = vmul.f32 %v2583, %v2767
        %v2770 = vmul.f32 %v2230, %v2767
        %v2771 = vmul.f32 %v2231, %v2767
        %v2772 = vmul.f32 %v2584, %v2767
        %v2773 = vmul.f32 %v2585, %v2767
        %v2780 = vrot.slane %v2768, 2
        %v2781 = vrot.slane %v2770, 2
        %v2782 = vsel %vm781, %v2780, %v2781
        %v2783 = vrot.slane %v2769, 2
        %v2784 = vrot.slane %v2771, 2
        %v2785 = vsel %vm781, %v2783, %v2784
        %v2786 = vrot.slane %v2772, 2
        %v2787 = vsel %vm781, %v2781, %v2786
        %v2788 = vrot.slane %v2773, 2
        %v2789 = vsel %vm781, %v2784, %v2788
        %2790 = vrot.lane.b32.xlu0 %v2782, 127
        %v2791 = vpop.permute.xlu0 %2790
        %2792 = vrot.lane.b32.xlu0 %v2785, 127
        %v2793 = vpop.permute.xlu0 %2792
        %2794 = vrot.lane.b32.xlu0 %v2787, 127
        %v2795 = vpop.permute.xlu0 %2794
        %2796 = vrot.lane.b32.xlu0 %v2789, 127
        %v2797 = vpop.permute.xlu0 %2796
        %v2798 = vsel %vm256, %v2791, %v2793
        %v2799 = vsel %vm256, %v2795, %v2797
        %v2804 = vadd.f32 %v2678, %v2798
        %v2805 = vadd.f32 %v2679, %v2793
        %v2806 = vadd.f32 %v2680, %v2799
        %v2807 = vadd.f32 %v2681, %v2797
        %s2808 = sld [smem:[#allocation2 + $0x1a]]
        %v2809 = vstv %s2808
        %v2810 = vmul.f32 %v2582, %v2809
        %v2811 = vmul.f32 %v2583, %v2809
        %v2812 = vmul.f32 %v2230, %v2809
        %v2813 = vmul.f32 %v2231, %v2809
        %v2814 = vmul.f32 %v2584, %v2809
        %v2815 = vmul.f32 %v2585, %v2809
        %v2822 = vrot.slane %v2810, 2
        %v2823 = vrot.slane %v2812, 2
        %v2824 = vsel %vm781, %v2822, %v2823
        %v2825 = vrot.slane %v2811, 2
        %v2826 = vrot.slane %v2813, 2
        %v2827 = vsel %vm781, %v2825, %v2826
        %v2828 = vrot.slane %v2814, 2
        %v2829 = vsel %vm781, %v2823, %v2828
        %v2830 = vrot.slane %v2815, 2
        %v2831 = vsel %vm781, %v2826, %v2830
        %2832 = vrot.lane.b32.xlu0 %v2824, 126
        %v2833 = vpop.permute.xlu0 %2832
        %2834 = vrot.lane.b32.xlu0 %v2827, 126
        %v2835 = vpop.permute.xlu0 %2834
        %2836 = vrot.lane.b32.xlu0 %v2829, 126
        %v2837 = vpop.permute.xlu0 %2836
        %2838 = vrot.lane.b32.xlu0 %v2831, 126
        %v2839 = vpop.permute.xlu0 %2838
        %v2840 = vsel %vm341, %v2833, %v2835
        %v2841 = vsel %vm341, %v2837, %v2839
        %v2846 = vadd.f32 %v2720, %v2840
        %v2847 = vadd.f32 %v2721, %v2835
        %v2848 = vadd.f32 %v2722, %v2841
        %v2849 = vadd.f32 %v2723, %v2839
        %s2850 = sld [smem:[#allocation2 + $0x35]]
        %v2851 = vstv %s2850
        %v2852 = vmul.f32 %v2582, %v2851
        %v2853 = vmul.f32 %v2583, %v2851
        %v2854 = vmul.f32 %v2230, %v2851
        %v2855 = vmul.f32 %v2231, %v2851
        %v2856 = vmul.f32 %v2584, %v2851
        %v2857 = vmul.f32 %v2585, %v2851
        %v2864 = vrot.slane %v2852, 2
        %v2865 = vrot.slane %v2854, 2
        %v2866 = vsel %vm781, %v2864, %v2865
        %v2867 = vrot.slane %v2853, 2
        %v2868 = vrot.slane %v2855, 2
        %v2869 = vsel %vm781, %v2867, %v2868
        %v2870 = vrot.slane %v2856, 2
        %v2871 = vsel %vm781, %v2865, %v2870
        %v2872 = vrot.slane %v2857, 2
        %v2873 = vsel %vm781, %v2868, %v2872
        %2874 = vrot.lane.b32.xlu0 %v2866, 126
        %v2875 = vpop.permute.xlu0 %2874
        %2876 = vrot.lane.b32.xlu0 %v2869, 126
        %v2877 = vpop.permute.xlu0 %2876
        %2878 = vrot.lane.b32.xlu0 %v2871, 126
        %v2879 = vpop.permute.xlu0 %2878
        %2880 = vrot.lane.b32.xlu0 %v2873, 126
        %v2881 = vpop.permute.xlu0 %2880
        %v2882 = vsel %vm341, %v2875, %v2877
        %v2883 = vsel %vm341, %v2879, %v2881
        %v2888 = vadd.f32 %v2762, %v2882
        %v2889 = vadd.f32 %v2763, %v2877
        %v2890 = vadd.f32 %v2764, %v2883
        %v2891 = vadd.f32 %v2765, %v2881
        %s2892 = sld [smem:[#allocation2 + $0x50]]
        %v2893 = vstv %s2892
        %v2894 = vmul.f32 %v2582, %v2893
        %v2895 = vmul.f32 %v2583, %v2893
        %v2896 = vmul.f32 %v2230, %v2893
        %v2897 = vmul.f32 %v2231, %v2893
        %v2898 = vmul.f32 %v2584, %v2893
        %v2899 = vmul.f32 %v2585, %v2893
        %v2906 = vrot.slane %v2894, 2
        %v2907 = vrot.slane %v2896, 2
        %v2908 = vsel %vm781, %v2906, %v2907
        %v2909 = vrot.slane %v2895, 2
        %v2910 = vrot.slane %v2897, 2
        %v2911 = vsel %vm781, %v2909, %v2910
        %v2912 = vrot.slane %v2898, 2
        %v2913 = vsel %vm781, %v2907, %v2912
        %v2914 = vrot.slane %v2899, 2
        %v2915 = vsel %vm781, %v2910, %v2914
        %2916 = vrot.lane.b32.xlu0 %v2908, 126
        %v2917 = vpop.permute.xlu0 %2916
        %2918 = vrot.lane.b32.xlu0 %v2911, 126
        %v2919 = vpop.permute.xlu0 %2918
        %2920 = vrot.lane.b32.xlu0 %v2913, 126
        %v2921 = vpop.permute.xlu0 %2920
        %2922 = vrot.lane.b32.xlu0 %v2915, 126
        %v2923 = vpop.permute.xlu0 %2922
        %v2924 = vsel %vm341, %v2917, %v2919
        %v2925 = vsel %vm341, %v2921, %v2923
        %v2930 = vadd.f32 %v2804, %v2924
        %v2931 = vadd.f32 %v2805, %v2919
        %v2932 = vadd.f32 %v2806, %v2925
        %v2933 = vadd.f32 %v2807, %v2923
        %2934 = vst [vmem:[%s197] sm:$0xff] %v2846
        %vm2935 = vcmask 130048
        %2936 = vst.msk [vmem:[%s197 + $0x8] sm:$0xff] %vm2935, %v2847
        %2937 = vst [vmem:[%s197 + $0x10] sm:$0xff] %v2848
        %2938 = vst.msk [vmem:[%s197 + $0x18] sm:$0xff] %vm2935, %v2849
        %s2939 = scalar_lea.vmem %s197, 32
        %2940 = vst [vmem:[%s2939] sm:$0xff] %v2888
        %2941 = vst.msk [vmem:[%s2939 + $0x8] sm:$0xff] %vm2935, %v2889
        %2942 = vst [vmem:[%s2939 + $0x10] sm:$0xff] %v2890
        %2943 = vst.msk [vmem:[%s2939 + $0x18] sm:$0xff] %vm2935, %v2891
        %s2944 = scalar_lea.vmem %s197, 64
        %2945 = vst [vmem:[%s2944] sm:$0xff] %v2930
        %2946 = vst.msk [vmem:[%s2944 + $0x8] sm:$0xff] %vm2935, %v2931
        %2947 = vst [vmem:[%s2944 + $0x10] sm:$0xff] %v2932
        %2948 = vst.msk [vmem:[%s2944 + $0x18] sm:$0xff] %vm2935, %v2933
        %p2949 = scmp.lt.s32.totalorder %s16, 1
        %s2950 = scalar_select %p2949, %s16, 1
        %s2951 = smul.addr %s2950, 12
        %s2952 = smul.addr %s2951, 8
        %s2953 = scalar_lea.vmem %s3, %s2952
        // Predicated region
        $region41: #{conv2d_pallas.1} parent=31 // pred_check
          %p2954 = pneg %p102
        $region42: #{conv2d_pallas.1} parent=31 // pred_check_branch
          %2956 = sbr.rel (%p2954) target = $region44
        $region43: #{conv2d_pallas.1} parent=31 // pred_region
          _
        $region44: #{conv2d_pallas.1} parent=31 // pred_fallthru
          _
      $region32: #{conv2d_pallas.1} parent=5 // pred_fallthru
        _
      %p2957 = scmp.le.s32.totalorder 2, %s11
      // Predicated region
      $region45: #{conv2d_pallas.1} parent=5 // pred_check
        %p2958 = pneg %p2957
      $region46: #{conv2d_pallas.1} parent=5 // pred_check_branch
        %2960 = sbr.rel (%p2958) target = $region48
      $region47: #{conv2d_pallas.1} parent=5 // pred_region
        %s2961 = ssub.s32 %s11, 2
        // Predicated region
        $region49: #{conv2d_pallas.1} parent=47 // pred_check
          %p2962 = pneg %p108
        $region50: #{conv2d_pallas.1} parent=47 // pred_check_branch
          %2964 = sbr.rel (%p2962) target = $region52
        $region51: #{conv2d_pallas.1} parent=47 // pred_region
          %p2965 = scmp.lt.s32.totalorder %s17, 1
          %s2966 = scalar_select %p2965, %s17, 1
          %s2967 = smul.addr %s2966, 12
          %s2968 = smul.addr %s2967, 8
          %s2969 = scalar_lea.vmem %s3, %s2968
        $region52: #{conv2d_pallas.1} parent=47 // pred_fallthru
          _
      $region48: #{conv2d_pallas.1} parent=5 // pred_fallthru
        _
    $region6: #{conv2d_pallas.1} parent=1 // loop_footer
      %s15 = sadd.s32 1, %s11
    $region7: #{conv2d_pallas.1} parent=1 // loop_footer_branch
      %10 = sbr.rel target = $region3
    $region8: #{conv2d_pallas.1} parent=1 // loop_exit
      _
    %2970 = vsyncpa [#allocation3], 1
    %s2971 = scalar_lea.sflag [#allocation3], 1
    %2972 = vsyncpa %s2971, 1
    %2973 = vsyncpa [#allocation5], 1

</llo_original>
